<compile_context>
chip_gen: v6e
topology: v6e:2x2x1
jax: 0.10.0
libtpu: 0.0.40
codegen_flags: <defaults>
</compile_context>

<pallas_src>
from functools import partial

import jax
import jax.numpy as jnp
from jax.experimental import pallas as pl
from jax.experimental.pallas import tpu as pltpu

LANE = 128


def _round_up(x, m):
    return ((x + m - 1) // m) * m


# ------------------------------ Pallas kernels ------------------------------ #
def _stage_pad_rows(pad_ref, HWo, pad_rows, Ocp):
    """Zero only the top/bottom halo rows (the middle is always overwritten)."""
    zeros_pad = jnp.zeros((pad_rows, Ocp), jnp.float32)
    pad_ref[pl.ds(0, pad_rows), :] = zeros_pad
    pad_ref[pl.ds(pad_rows + HWo, pad_rows), :] = zeros_pad


def _col_masks(HWo, Wo):
    """Hoisted {0,1} left/right column masks for the kw=0 / kw=2 taps."""
    wo_idx = jax.lax.broadcasted_iota(jnp.int32, (HWo, 1), 0) % Wo
    mask_l = (wo_idx >= 1).astype(jnp.float32)
    mask_r = (wo_idx < Wo - 1).astype(jnp.float32)
    return mask_l, mask_r


def _taps_matmul(src_ref, w_ref, mask_l, mask_r, HWo, Wo, pad_rows, Ocp):
    """3x3 conv as 9 accumulated MXU matmuls over row-shifted loads of the
    zero-halo activation staged in src_ref ((HWo+2*pad_rows, Ocp) f32).
    w_ref holds the 9 (Ocp, Ocp) bf16 weight tiles stacked along rows."""
    acc = None
    for kh in range(3):
        for kw in range(3):
            d = (kh - 1) * Wo + (kw - 1)
            t = src_ref[pl.ds(pad_rows + d, HWo), :]
            if kw == 0:                     # source column wo-1 must be >= 0
                t = t * mask_l
            elif kw == 2:                   # source column wo+1 must be < Wo
                t = t * mask_r
            tap = kh * 3 + kw
            y = jnp.dot(t.astype(jnp.bfloat16),
                        w_ref[pl.ds(tap * Ocp, Ocp), :],
                        preferred_element_type=jnp.float32)
            acc = y if acc is None else acc + y
    return acc


def _resblock_ds_kernel(p1_ref, w1d_ref, b1d_ref, w2_ref, b2_ref, o_ref,
                        pad_ref, *, Ho, Wo, pad_rows, Ocp):
    """Downsample variant: conv1 im2col patches come from the wrapper; the 1x1
    strided downsample is fused into conv1's output lanes [Ocp:2*Ocp)."""
    HWo = Ho * Wo
    _stage_pad_rows(pad_ref, HWo, pad_rows, Ocp)

    # conv1+BN1 and downsample+BNd in one (HWo, K1p) @ (K1p, 2*Ocp) matmul.
    y = jnp.dot(p1_ref[0], w1d_ref[...], preferred_element_type=jnp.float32)
    y = y + b1d_ref[...]
    y1 = jnp.maximum(y[:, :Ocp], 0.0)      # conv1 + BN1 + ReLU
    res = y[:, Ocp:]                       # downsample(x) = 1x1 strided conv + BN

    # conv2 + BN2 over the staged y1, then residual add + final ReLU.
    mask_l, mask_r = _col_masks(HWo, Wo)
    pad_ref[pl.ds(pad_rows, HWo), :] = y1
    y2 = _taps_matmul(pad_ref, w2_ref, mask_l, mask_r, HWo, Wo, pad_rows, Ocp)
    o_ref[0] = jnp.maximum(y2 + b2_ref[...] + res, 0.0).astype(o_ref.dtype)


def _resblock_id_kernel(x_ref, w1_ref, b1_ref, w2_ref, b2_ref, o_ref,
                        pad_ref, *, Ho, Wo, pad_rows, Ocp):
    """Identity variant (stride==1, ic==oc): conv1's im2col is built in-kernel
    from a single staged copy of the input; the residual is the raw f32 input."""
    HWo = Ho * Wo
    _stage_pad_rows(pad_ref, HWo, pad_rows, Ocp)
    mask_l, mask_r = _col_masks(HWo, Wo)

    # conv1 + BN1 + ReLU: in-kernel 3x3 im2col over the staged input.
    pad_ref[pl.ds(pad_rows, HWo), :] = x_ref[0]
    y1 = _taps_matmul(pad_ref, w1_ref, mask_l, mask_r, HWo, Wo, pad_rows, Ocp)
    y1 = jnp.maximum(y1 + b1_ref[...], 0.0)

    # conv2 + BN2: x is fully consumed, so reuse the same scratch for y1.
    pad_ref[pl.ds(pad_rows, HWo), :] = y1
    y2 = _taps_matmul(pad_ref, w2_ref, mask_l, mask_r, HWo, Wo, pad_rows, Ocp)

    # identity residual add (kept in f32) + final ReLU
    o_ref[0] = jnp.maximum(y2 + b2_ref[...] + x_ref[0], 0.0).astype(o_ref.dtype)


# ------------------------------ glue helpers -------------------------------- #
def _fold_bn(w, b, gamma, beta, mean, var, eps=1e-5):
    """Fold eval-mode BatchNorm into conv weight (OIHW) and bias."""
    scale = gamma / jnp.sqrt(var + eps)
    wf = w * scale[:, None, None, None]
    bf = (b - mean) * scale + beta
    return wf, bf


def _pad_dim(a, axis, target):
    pad = target - a.shape[axis]
    if pad <= 0:
        return a
    cfg = [(0, 0)] * a.ndim
    cfg[axis] = (0, pad)
    return jnp.pad(a, cfg)


def _pack_3x3(wf, cin, oc, ocp):
    """OIHW 3x3 weight -> (9*ocp, ocp) bf16: tap-major rows, per-tap input
    channels padded to ocp (matches the kernel's per-tap matmuls)."""
    wt = jnp.transpose(wf, (2, 3, 1, 0)).reshape(9, cin, oc)
    wt = _pad_dim(_pad_dim(wt, 1, ocp), 2, ocp)
    return wt.reshape(9 * ocp, ocp).astype(jnp.bfloat16)


@partial(jax.jit, static_argnames=("stride",))
def residual_block_forward(x_nchw, params, *, stride):
    N, Cin, H, W = x_nchw.shape
    Oc = params["w1"].shape[0]
    Ho = (H - 1) // stride + 1
    Wo = (W - 1) // stride + 1
    HWo = Ho * Wo

    Ocp = _round_up(Oc, LANE)              # lane-dense padded output channels
    pad_rows = _round_up(Wo + 1, 8)        # zero halo rows around the scratch

    x = jnp.transpose(x_nchw, (0, 2, 3, 1))        # NCHW -> NHWC

    w1f, b1f = _fold_bn(params["w1"], params["b1"], *params["bn1"])
    w2f, b2f = _fold_bn(params["w2"], params["b2"], *params["bn2"])

    w2k = _pack_3x3(w2f, Oc, Oc, Ocp)                       # (9*Ocp, Ocp) bf16
    b2v = _pad_dim(b2f.reshape(1, Oc), 1, Ocp)              # (1, Ocp) f32

    has_ds = (stride != 1) or (Cin != Oc)

    if not has_ds:
        # -------- identity path: conv1 im2col is built in-kernel -----------
        w1k = _pack_3x3(w1f, Cin, Oc, Ocp)
        b1v = _pad_dim(b1f.reshape(1, Oc), 1, Ocp)
        xin = _pad_dim(x.reshape(N, HWo, Cin), 2, Ocp)      # f32, lane-padded
        kernel = partial(_resblock_id_kernel, Ho=Ho, Wo=Wo,
                         pad_rows=pad_rows, Ocp=Ocp)
        in_specs = [
            pl.BlockSpec((1, HWo, Ocp), lambda n: (n, 0, 0)),   # x
            pl.BlockSpec((9 * Ocp, Ocp), lambda n: (0, 0)),     # w1 (BN folded)
            pl.BlockSpec((1, Ocp), lambda n: (0, 0)),           # b1
            pl.BlockSpec((9 * Ocp, Ocp), lambda n: (0, 0)),     # w2 (BN folded)
            pl.BlockSpec((1, Ocp), lambda n: (0, 0)),           # b2
        ]
        args = (xin, w1k, b1v, w2k, b2v)
    else:
        # -------- downsample path: wrapper im2col (stride may be != 1),
        #          1x1 downsample fused into conv1's output lanes -----------
        K1p = _round_up(9 * Cin, LANE)
        xp = jnp.pad(x, ((0, 0), (1, 1), (1, 1), (0, 0)))
        cols = [xp[:, kh:kh + (Ho - 1) * stride + 1:stride,
                    kw:kw + (Wo - 1) * stride + 1:stride, :]
                for kh in range(3) for kw in range(3)]
        p1 = jnp.concatenate(cols, axis=-1).reshape(N, HWo, 9 * Cin)
        p1 = _pad_dim(p1, 2, K1p).astype(jnp.bfloat16)

        wdf, bdf = _fold_bn(params["wd"], params["bd"], *params["bnd"])
        w1k = jnp.transpose(w1f, (2, 3, 1, 0)).reshape(9 * Cin, Oc)
        # the center tap (kh=kw=1) columns of p1 ARE the strided input, so the
        # 1x1 downsample weight lives at contraction rows [4*Cin, 5*Cin)
        wd_rows = jnp.zeros((9 * Cin, Oc), jnp.float32)
        wd_rows = wd_rows.at[4 * Cin:5 * Cin, :].set(wdf.reshape(Oc, Cin).T)
        w1d = jnp.concatenate(
            [_pad_dim(_pad_dim(w1k, 0, K1p), 1, Ocp),
             _pad_dim(_pad_dim(wd_rows, 0, K1p), 1, Ocp)],
            axis=1).astype(jnp.bfloat16)                     # (K1p, 2*Ocp)
        b1d = jnp.concatenate(
            [_pad_dim(b1f.reshape(1, Oc), 1, Ocp),
             _pad_dim(bdf.reshape(1, Oc), 1, Ocp)], axis=1)  # (1, 2*Ocp) f32

        kernel = partial(_resblock_ds_kernel, Ho=Ho, Wo=Wo,
                         pad_rows=pad_rows, Ocp=Ocp)
        in_specs = [
            pl.BlockSpec((1, HWo, K1p), lambda n: (n, 0, 0)),   # im2col patches
            pl.BlockSpec((K1p, 2 * Ocp), lambda n: (0, 0)),     # [w1 | wd]
            pl.BlockSpec((1, 2 * Ocp), lambda n: (0, 0)),       # [b1 | bd]
            pl.BlockSpec((9 * Ocp, Ocp), lambda n: (0, 0)),     # w2
            pl.BlockSpec((1, Ocp), lambda n: (0, 0)),           # b2
        ]
        args = (p1, w1d, b1d, w2k, b2v)

    out = pl.pallas_call(
        kernel,
        out_shape=jax.ShapeDtypeStruct((N, HWo, Ocp), jnp.float32),
        grid=(N,),
        in_specs=in_specs,
        out_specs=pl.BlockSpec((1, HWo, Ocp), lambda n: (n, 0, 0)),
        scratch_shapes=[pltpu.VMEM((HWo + 2 * pad_rows, Ocp), jnp.float32)],
        compiler_params=pltpu.CompilerParams(
            dimension_semantics=("parallel",),
            vmem_limit_bytes=48 * 1024 * 1024),
    )(*args)

    # (N, HWo, Ocp) -> NCHW, dropping channel padding
    return out[:, :, :Oc].reshape(N, Ho, Wo, Oc).transpose(0, 3, 1, 2)


# --------------------------- pure-JAX reference ----------------------------- #
def _bn_eval(y, gamma, beta, mean, var, eps=1e-5):
    inv = gamma / jnp.sqrt(var + eps)
    return (y - mean[None, :, None, None]) * inv[None, :, None, None] + \
        beta[None, :, None, None]


def _conv_nchw(x, w, b, stride, pad):
    y = jax.lax.conv_general_dilated(
        x, w, window_strides=(stride, stride),
        padding=[(pad, pad), (pad, pad)],
        dimension_numbers=("NCHW", "OIHW", "NCHW"))
    return y + b[None, :, None, None]


def residual_block_reference(x, params, stride):
    ic = params["w1"].shape[1]
    oc = params["w1"].shape[0]
    out = _conv_nchw(x, params["w1"], params["b1"], stride, 1)
    out = jnp.maximum(_bn_eval(out, *params["bn1"]), 0.0)
    out = _conv_nchw(out, params["w2"], params["b2"], 1, 1)
    out = _bn_eval(out, *params["bn2"])
    if stride != 1 or ic != oc:
        res = _bn_eval(_conv_nchw(x, params["wd"], params["bd"], stride, 0),
                       *params["bnd"])
    else:
        res = x
    return jnp.maximum(out + res, 0.0)


# ---------------------------------- main ------------------------------------ #
if __name__ == "__main__":
    def bn_params(k, c):
        k0, k1, k2, k3 = jax.random.split(k, 4)
        gamma = jax.random.uniform(k0, (c,), jnp.float32, 0.5, 1.5)
        beta = 0.1 * jax.random.normal(k1, (c,), jnp.float32)
        mean = 0.1 * jax.random.normal(k2, (c,), jnp.float32)
        var = jax.random.uniform(k3, (c,), jnp.float32, 0.5, 1.5)
        return (gamma, beta, mean, var)

    def make_params(key, ic, oc, with_ds):
        ks = jax.random.split(key, 10)
        p = {
            "w1": 0.1 * jax.random.normal(ks[0], (oc, ic, 3, 3), jnp.float32),
            "b1": 0.05 * jax.random.normal(ks[1], (oc,), jnp.float32),
            "bn1": bn_params(ks[2], oc),
            "w2": 0.1 * jax.random.normal(ks[3], (oc, oc, 3, 3), jnp.float32),
            "b2": 0.05 * jax.random.normal(ks[4], (oc,), jnp.float32),
            "bn2": bn_params(ks[5], oc),
        }
        if with_ds:
            p["wd"] = 0.1 * jax.random.normal(ks[6], (oc, ic, 1, 1), jnp.float32)
            p["bd"] = 0.05 * jax.random.normal(ks[7], (oc,), jnp.float32)
            p["bnd"] = bn_params(ks[8], oc)
        return p

    key = jax.random.PRNGKey(0)
    N, H, W = 2, 16, 16
    # (ic, oc, stride): downsample branch active, then identity-residual case
    configs = [(4, 8, 2), (8, 8, 1)]

    for idx, (ic, oc, stride) in enumerate(configs):
        kp, kx = jax.random.split(jax.random.fold_in(key, idx))
        has_ds = (stride != 1) or (ic != oc)
        params = make_params(kp, ic, oc, has_ds)
        x = jax.random.normal(kx, (N, ic, H, W), jnp.float32)

        out = jax.block_until_ready(residual_block_forward(x, params, stride=stride))
        ref = jax.block_until_ready(residual_block_reference(x, params, stride))

        Ho = (H - 1) // stride + 1
        assert out.shape == ref.shape == (N, oc, Ho, Ho)
        if not bool(jnp.allclose(out, ref, atol=5e-2, rtol=5e-2)):
            raise SystemExit(
                f"mismatch vs reference (config {idx}): max abs err = "
                f"{float(jnp.max(jnp.abs(out - ref)))}")

    print("KERNEL_OK")
</pallas_src>

<mosaic_0001>
module attributes {stable_mosaic.version = 11 : i64} {
  func.func @_resblock_ds_kernel(%arg0: i32, %arg1: memref<1x64x128xbf16, #tpu.memory_space<vmem>>, %arg2: memref<128x256xbf16, #tpu.memory_space<vmem>>, %arg3: memref<1x256xf32, #tpu.memory_space<vmem>>, %arg4: memref<1152x128xbf16, #tpu.memory_space<vmem>>, %arg5: memref<1x128xf32, #tpu.memory_space<vmem>>, %arg6: memref<1x64x128xf32, #tpu.memory_space<vmem>>, %arg7: memref<96x128xf32, #tpu.memory_space<vmem>>) attributes {dimension_semantics = [#tpu.dimension_semantics<parallel>], iteration_bounds = array<i64: 2>, scalar_prefetch = 0 : i64, scratch_operands = 1 : i64, tpu.core_type = #tpu.core_type<tc>, window_params = [{transform_indices = @transform_0, window_bounds = array<i64: 1, 64, 128>}, {pipeline_mode = #tpu.pipeline_mode<synchronous>, transform_indices = @transform_1, window_bounds = array<i64: 128, 256>}, {pipeline_mode = #tpu.pipeline_mode<synchronous>, transform_indices = @transform_2, window_bounds = array<i64: 1, 256>}, {pipeline_mode = #tpu.pipeline_mode<synchronous>, transform_indices = @transform_3, window_bounds = array<i64: 1152, 128>}, {pipeline_mode = #tpu.pipeline_mode<synchronous>, transform_indices = @transform_4, window_bounds = array<i64: 1, 128>}, {transform_indices = @transform_5, window_bounds = array<i64: 1, 64, 128>}]} {
    %cst = arith.constant 0.000000e+00 : f32
    %0 = vector.broadcast %cst : f32 to vector<16x128xf32>
    %c0 = arith.constant 0 : index
    %c0_0 = arith.constant 0 : index
    %1 = vector.load %arg7[%c0, %c0_0] : memref<96x128xf32, #tpu.memory_space<vmem>>, vector<16x128xf32>
    tpu.vector_store %arg7[%c0, %c0_0], %0 {strides = array<i32>} : memref<96x128xf32, #tpu.memory_space<vmem>>, vector<16x128xf32>,
    %c80 = arith.constant 80 : index
    %c0_1 = arith.constant 0 : index
    %2 = vector.load %arg7[%c80, %c0_1] : memref<96x128xf32, #tpu.memory_space<vmem>>, vector<16x128xf32>
    tpu.vector_store %arg7[%c80, %c0_1], %0 {strides = array<i32>} : memref<96x128xf32, #tpu.memory_space<vmem>>, vector<16x128xf32>,
    %c0_2 = arith.constant 0 : index
    %c0_3 = arith.constant 0 : index
    %c0_4 = arith.constant 0 : index
    %3 = vector.load %arg1[%c0_2, %c0_3, %c0_4] : memref<1x64x128xbf16, #tpu.memory_space<vmem>>, vector<1x64x128xbf16>
    %4 = vector.shape_cast %3 : vector<1x64x128xbf16> to vector<64x128xbf16>
    %c0_5 = arith.constant 0 : index
    %c0_6 = arith.constant 0 : index
    %5 = vector.load %arg2[%c0_5, %c0_6] : memref<128x256xbf16, #tpu.memory_space<vmem>>, vector<128x256xbf16>
    %cst_7 = arith.constant dense<0.000000e+00> : vector<64x256xf32>
    %6 = tpu.matmul %4, %5, %cst_7 {dimension_numbers = #tpu.dot_dimension_numbers<[1], [0], [0], [1], [0, 0, 1, 1], [], []>} : vector<64x128xbf16>, vector<128x256xbf16>, vector<64x256xf32> -> vector<64x256xf32>
    %c0_8 = arith.constant 0 : index
    %c0_9 = arith.constant 0 : index
    %7 = vector.load %arg3[%c0_8, %c0_9] : memref<1x256xf32, #tpu.memory_space<vmem>>, vector<1x256xf32>
    %8 = vector.broadcast %7 : vector<1x256xf32> to vector<64x256xf32>
    %9 = arith.addf %6, %8 : vector<64x256xf32>
    %10 = vector.extract_strided_slice %9 {offsets = [0, 0], sizes = [64, 128], strides = [1, 1]} : vector<64x256xf32> to vector<64x128xf32>
    %cst_10 = arith.constant 0.000000e+00 : f32
    %11 = vector.broadcast %cst_10 : f32 to vector<64x128xf32>
    %12 = arith.maximumf %10, %11 : vector<64x128xf32>
    %13 = vector.extract_strided_slice %9 {offsets = [0, 128], sizes = [64, 128], strides = [1, 1]} : vector<64x256xf32> to vector<64x128xf32>
    %14 = tpu.iota {dimensions = array<i32: 0>} : vector<64x1xi32>
    %c8_i32 = arith.constant 8 : i32
    %c0_i32 = arith.constant 0 : i32
    %15 = arith.cmpi eq, %c8_i32, %c0_i32 : i32
    %c1_i32 = arith.constant 1 : i32
    %16 = arith.select %15, %c1_i32, %c8_i32 : i32
    %17 = vector.broadcast %16 : i32 to vector<64x1xi32>
    %18 = arith.remsi %14, %17 : vector<64x1xi32>
    %c0_i32_11 = arith.constant 0 : i32
    %19 = vector.broadcast %c0_i32_11 : i32 to vector<64x1xi32>
    %20 = arith.cmpi ne, %18, %19 : vector<64x1xi32>
    %c0_i32_12 = arith.constant 0 : i32
    %21 = vector.broadcast %c0_i32_12 : i32 to vector<64x1xi32>
    %22 = arith.cmpi slt, %18, %21 : vector<64x1xi32>
    %c0_i32_13 = arith.constant 0 : i32
    %23 = arith.cmpi slt, %16, %c0_i32_13 : i32
    %24 = vector.broadcast %23 : i1 to vector<64x1xi1>
    %25 = vector.broadcast %24 : vector<64x1xi1> to vector<64x1xi1>
    %26 = arith.xori %22, %25 : vector<64x1xi1>
    %27 = arith.andi %26, %20 : vector<64x1xi1>
    %28 = vector.broadcast %16 : i32 to vector<64x1xi32>
    %29 = arith.addi %18, %28 : vector<64x1xi32>
    %30 = arith.select %27, %29, %18 : vector<64x1xi1>, vector<64x1xi32>
    %c1_i32_14 = arith.constant 1 : i32
    %31 = vector.broadcast %c1_i32_14 : i32 to vector<64x1xi32>
    %32 = arith.cmpi sge, %30, %31 : vector<64x1xi32>
    %33 = arith.extui %32 : vector<64x1xi1> to vector<64x1xi32>
    %34 = arith.sitofp %33 : vector<64x1xi32> to vector<64x1xf32>
    %c7_i32 = arith.constant 7 : i32
    %35 = vector.broadcast %c7_i32 : i32 to vector<64x1xi32>
    %36 = arith.cmpi slt, %30, %35 : vector<64x1xi32>
    %37 = arith.extui %36 : vector<64x1xi1> to vector<64x1xi32>
    %38 = arith.sitofp %37 : vector<64x1xi32> to vector<64x1xf32>
    %c16 = arith.constant 16 : index
    %c0_15 = arith.constant 0 : index
    %39 = vector.load %arg7[%c16, %c0_15] : memref<96x128xf32, #tpu.memory_space<vmem>>, vector<64x128xf32>
    tpu.vector_store %arg7[%c16, %c0_15], %12 {strides = array<i32>} : memref<96x128xf32, #tpu.memory_space<vmem>>, vector<64x128xf32>,
    %c7 = arith.constant 7 : index
    %c0_16 = arith.constant 0 : index
    %40 = vector.load %arg7[%c7, %c0_16] : memref<96x128xf32, #tpu.memory_space<vmem>>, vector<64x128xf32>
    %41 = vector.broadcast %34 : vector<64x1xf32> to vector<64x128xf32>
    %42 = arith.mulf %40, %41 : vector<64x128xf32>
    %43 = arith.truncf %42 : vector<64x128xf32> to vector<64x128xbf16>
    %c0_17 = arith.constant 0 : index
    %c0_18 = arith.constant 0 : index
    %44 = vector.load %arg4[%c0_17, %c0_18] : memref<1152x128xbf16, #tpu.memory_space<vmem>>, vector<128x128xbf16>
    %cst_19 = arith.constant dense<0.000000e+00> : vector<64x128xf32>
    %45 = tpu.matmul %43, %44, %cst_19 {dimension_numbers = #tpu.dot_dimension_numbers<[1], [0], [0], [1], [0, 0, 1, 1], [], []>} : vector<64x128xbf16>, vector<128x128xbf16>, vector<64x128xf32> -> vector<64x128xf32>
    %c8 = arith.constant 8 : index
    %c0_20 = arith.constant 0 : index
    %46 = vector.load %arg7[%c8, %c0_20] : memref<96x128xf32, #tpu.memory_space<vmem>>, vector<64x128xf32>
    %47 = arith.truncf %46 : vector<64x128xf32> to vector<64x128xbf16>
    %c128 = arith.constant 128 : index
    %c0_21 = arith.constant 0 : index
    %48 = vector.load %arg4[%c128, %c0_21] : memref<1152x128xbf16, #tpu.memory_space<vmem>>, vector<128x128xbf16>
    %cst_22 = arith.constant dense<0.000000e+00> : vector<64x128xf32>
    %49 = tpu.matmul %47, %48, %cst_22 {dimension_numbers = #tpu.dot_dimension_numbers<[1], [0], [0], [1], [0, 0, 1, 1], [], []>} : vector<64x128xbf16>, vector<128x128xbf16>, vector<64x128xf32> -> vector<64x128xf32>
    %50 = arith.addf %45, %49 : vector<64x128xf32>
    %c9 = arith.constant 9 : index
    %c0_23 = arith.constant 0 : index
    %51 = vector.load %arg7[%c9, %c0_23] : memref<96x128xf32, #tpu.memory_space<vmem>>, vector<64x128xf32>
    %52 = vector.broadcast %38 : vector<64x1xf32> to vector<64x128xf32>
    %53 = arith.mulf %51, %52 : vector<64x128xf32>
    %54 = arith.truncf %53 : vector<64x128xf32> to vector<64x128xbf16>
    %c256 = arith.constant 256 : index
    %c0_24 = arith.constant 0 : index
    %55 = vector.load %arg4[%c256, %c0_24] : memref<1152x128xbf16, #tpu.memory_space<vmem>>, vector<128x128xbf16>
    %cst_25 = arith.constant dense<0.000000e+00> : vector<64x128xf32>
    %56 = tpu.matmul %54, %55, %cst_25 {dimension_numbers = #tpu.dot_dimension_numbers<[1], [0], [0], [1], [0, 0, 1, 1], [], []>} : vector<64x128xbf16>, vector<128x128xbf16>, vector<64x128xf32> -> vector<64x128xf32>
    %57 = arith.addf %50, %56 : vector<64x128xf32>
    %c15 = arith.constant 15 : index
    %c0_26 = arith.constant 0 : index
    %58 = vector.load %arg7[%c15, %c0_26] : memref<96x128xf32, #tpu.memory_space<vmem>>, vector<64x128xf32>
    %59 = vector.broadcast %34 : vector<64x1xf32> to vector<64x128xf32>
    %60 = arith.mulf %58, %59 : vector<64x128xf32>
    %61 = arith.truncf %60 : vector<64x128xf32> to vector<64x128xbf16>
    %c384 = arith.constant 384 : index
    %c0_27 = arith.constant 0 : index
    %62 = vector.load %arg4[%c384, %c0_27] : memref<1152x128xbf16, #tpu.memory_space<vmem>>, vector<128x128xbf16>
    %cst_28 = arith.constant dense<0.000000e+00> : vector<64x128xf32>
    %63 = tpu.matmul %61, %62, %cst_28 {dimension_numbers = #tpu.dot_dimension_numbers<[1], [0], [0], [1], [0, 0, 1, 1], [], []>} : vector<64x128xbf16>, vector<128x128xbf16>, vector<64x128xf32> -> vector<64x128xf32>
    %64 = arith.addf %57, %63 : vector<64x128xf32>
    %c16_29 = arith.constant 16 : index
    %c0_30 = arith.constant 0 : index
    %65 = vector.load %arg7[%c16_29, %c0_30] : memref<96x128xf32, #tpu.memory_space<vmem>>, vector<64x128xf32>
    %66 = arith.truncf %65 : vector<64x128xf32> to vector<64x128xbf16>
    %c512 = arith.constant 512 : index
    %c0_31 = arith.constant 0 : index
    %67 = vector.load %arg4[%c512, %c0_31] : memref<1152x128xbf16, #tpu.memory_space<vmem>>, vector<128x128xbf16>
    %cst_32 = arith.constant dense<0.000000e+00> : vector<64x128xf32>
    %68 = tpu.matmul %66, %67, %cst_32 {dimension_numbers = #tpu.dot_dimension_numbers<[1], [0], [0], [1], [0, 0, 1, 1], [], []>} : vector<64x128xbf16>, vector<128x128xbf16>, vector<64x128xf32> -> vector<64x128xf32>
    %69 = arith.addf %64, %68 : vector<64x128xf32>
    %c17 = arith.constant 17 : index
    %c0_33 = arith.constant 0 : index
    %70 = vector.load %arg7[%c17, %c0_33] : memref<96x128xf32, #tpu.memory_space<vmem>>, vector<64x128xf32>
    %71 = vector.broadcast %38 : vector<64x1xf32> to vector<64x128xf32>
    %72 = arith.mulf %70, %71 : vector<64x128xf32>
    %73 = arith.truncf %72 : vector<64x128xf32> to vector<64x128xbf16>
    %c640 = arith.constant 640 : index
    %c0_34 = arith.constant 0 : index
    %74 = vector.load %arg4[%c640, %c0_34] : memref<1152x128xbf16, #tpu.memory_space<vmem>>, vector<128x128xbf16>
    %cst_35 = arith.constant dense<0.000000e+00> : vector<64x128xf32>
    %75 = tpu.matmul %73, %74, %cst_35 {dimension_numbers = #tpu.dot_dimension_numbers<[1], [0], [0], [1], [0, 0, 1, 1], [], []>} : vector<64x128xbf16>, vector<128x128xbf16>, vector<64x128xf32> -> vector<64x128xf32>
    %76 = arith.addf %69, %75 : vector<64x128xf32>
    %c23 = arith.constant 23 : index
    %c0_36 = arith.constant 0 : index
    %77 = vector.load %arg7[%c23, %c0_36] : memref<96x128xf32, #tpu.memory_space<vmem>>, vector<64x128xf32>
    %78 = vector.broadcast %34 : vector<64x1xf32> to vector<64x128xf32>
    %79 = arith.mulf %77, %78 : vector<64x128xf32>
    %80 = arith.truncf %79 : vector<64x128xf32> to vector<64x128xbf16>
    %c768 = arith.constant 768 : index
    %c0_37 = arith.constant 0 : index
    %81 = vector.load %arg4[%c768, %c0_37] : memref<1152x128xbf16, #tpu.memory_space<vmem>>, vector<128x128xbf16>
    %cst_38 = arith.constant dense<0.000000e+00> : vector<64x128xf32>
    %82 = tpu.matmul %80, %81, %cst_38 {dimension_numbers = #tpu.dot_dimension_numbers<[1], [0], [0], [1], [0, 0, 1, 1], [], []>} : vector<64x128xbf16>, vector<128x128xbf16>, vector<64x128xf32> -> vector<64x128xf32>
    %83 = arith.addf %76, %82 : vector<64x128xf32>
    %c24 = arith.constant 24 : index
    %c0_39 = arith.constant 0 : index
    %84 = vector.load %arg7[%c24, %c0_39] : memref<96x128xf32, #tpu.memory_space<vmem>>, vector<64x128xf32>
    %85 = arith.truncf %84 : vector<64x128xf32> to vector<64x128xbf16>
    %c896 = arith.constant 896 : index
    %c0_40 = arith.constant 0 : index
    %86 = vector.load %arg4[%c896, %c0_40] : memref<1152x128xbf16, #tpu.memory_space<vmem>>, vector<128x128xbf16>
    %cst_41 = arith.constant dense<0.000000e+00> : vector<64x128xf32>
    %87 = tpu.matmul %85, %86, %cst_41 {dimension_numbers = #tpu.dot_dimension_numbers<[1], [0], [0], [1], [0, 0, 1, 1], [], []>} : vector<64x128xbf16>, vector<128x128xbf16>, vector<64x128xf32> -> vector<64x128xf32>
    %88 = arith.addf %83, %87 : vector<64x128xf32>
    %c25 = arith.constant 25 : index
    %c0_42 = arith.constant 0 : index
    %89 = vector.load %arg7[%c25, %c0_42] : memref<96x128xf32, #tpu.memory_space<vmem>>, vector<64x128xf32>
    %90 = vector.broadcast %38 : vector<64x1xf32> to vector<64x128xf32>
    %91 = arith.mulf %89, %90 : vector<64x128xf32>
    %92 = arith.truncf %91 : vector<64x128xf32> to vector<64x128xbf16>
    %c1024 = arith.constant 1024 : index
    %c0_43 = arith.constant 0 : index
    %93 = vector.load %arg4[%c1024, %c0_43] : memref<1152x128xbf16, #tpu.memory_space<vmem>>, vector<128x128xbf16>
    %cst_44 = arith.constant dense<0.000000e+00> : vector<64x128xf32>
    %94 = tpu.matmul %92, %93, %cst_44 {dimension_numbers = #tpu.dot_dimension_numbers<[1], [0], [0], [1], [0, 0, 1, 1], [], []>} : vector<64x128xbf16>, vector<128x128xbf16>, vector<64x128xf32> -> vector<64x128xf32>
    %95 = arith.addf %88, %94 : vector<64x128xf32>
    %c0_45 = arith.constant 0 : index
    %c0_46 = arith.constant 0 : index
    %96 = vector.load %arg5[%c0_45, %c0_46] : memref<1x128xf32, #tpu.memory_space<vmem>>, vector<1x128xf32>
    %97 = vector.broadcast %96 : vector<1x128xf32> to vector<64x128xf32>
    %98 = arith.addf %95, %97 : vector<64x128xf32>
    %99 = arith.addf %98, %13 : vector<64x128xf32>
    %cst_47 = arith.constant 0.000000e+00 : f32
    %100 = vector.broadcast %cst_47 : f32 to vector<64x128xf32>
    %101 = arith.maximumf %99, %100 : vector<64x128xf32>
    %c0_48 = arith.constant 0 : index
    %c0_49 = arith.constant 0 : index
    %c0_50 = arith.constant 0 : index
    %102 = vector.load %arg6[%c0_48, %c0_49, %c0_50] : memref<1x64x128xf32, #tpu.memory_space<vmem>>, vector<1x64x128xf32>
    %103 = vector.shape_cast %102 : vector<1x64x128xf32> to vector<64x128xf32>
    %104 = vector.shape_cast %101 : vector<64x128xf32> to vector<1x64x128xf32>
    tpu.vector_store %arg6[%c0_48, %c0_49, %c0_50], %104 {strides = array<i32>} : memref<1x64x128xf32, #tpu.memory_space<vmem>>, vector<1x64x128xf32>,
    return
  }
  func.func @transform_0(%arg0: i32) -> (i32, i32, i32) {
    %c0_i32 = arith.constant 0 : i32
    %c0_i32_0 = arith.constant 0 : i32
    %c0_i32_1 = arith.constant 0 : i32
    return %arg0, %c0_i32, %c0_i32_0 : i32, i32, i32
  }
  func.func @transform_1(%arg0: i32) -> (i32, i32) {
    %c0_i32 = arith.constant 0 : i32
    %c0_i32_0 = arith.constant 0 : i32
    %c0_i32_1 = arith.constant 0 : i32
    return %c0_i32, %c0_i32_0 : i32, i32
  }
  func.func @transform_2(%arg0: i32) -> (i32, i32) {
    %c0_i32 = arith.constant 0 : i32
    %c0_i32_0 = arith.constant 0 : i32
    %c0_i32_1 = arith.constant 0 : i32
    return %c0_i32, %c0_i32_0 : i32, i32
  }
  func.func @transform_3(%arg0: i32) -> (i32, i32) {
    %c0_i32 = arith.constant 0 : i32
    %c0_i32_0 = arith.constant 0 : i32
    %c0_i32_1 = arith.constant 0 : i32
    return %c0_i32, %c0_i32_0 : i32, i32
  }
  func.func @transform_4(%arg0: i32) -> (i32, i32) {
    %c0_i32 = arith.constant 0 : i32
    %c0_i32_0 = arith.constant 0 : i32
    %c0_i32_1 = arith.constant 0 : i32
    return %c0_i32, %c0_i32_0 : i32, i32
  }
  func.func @transform_5(%arg0: i32) -> (i32, i32, i32) {
    %c0_i32 = arith.constant 0 : i32
    %c0_i32_0 = arith.constant 0 : i32
    %c0_i32_1 = arith.constant 0 : i32
    return %arg0, %c0_i32, %c0_i32_0 : i32, i32, i32
  }
}

</mosaic_0001>

<llo_original>
// kernel: residual_block_forward.1
$region0: #{residual_block_forward.1}
  #allocation0 [shape = 'u32[]', space=smem, size = 0x4, offset = 0x4, fixed_abs, tag = 'smem constant byte address 0x4 - core index']
  #allocation1 [shape = 'u32[144,128]{1,0:T(1,128)}', space=vmem, size = 0x12000, scoped, tag = 'internal scratch']
  #allocation2 [shape = 'f32[96,128]{1,0:T(8,128)}', space=vmem, size = 0xc000, scoped, tag = 'scratch operand']
  %s0 = inlined_call_operand.vmem [shape: bf16[2,64,128], index: 0, kind: input, shape index: {}]
  %s1 = inlined_call_operand.vmem [shape: bf16[128,256], index: 1, kind: input, shape index: {}]
  %s2 = inlined_call_operand.vmem [shape: f32[1,256], index: 2, kind: input, shape index: {}]
  %s3 = inlined_call_operand.vmem [shape: bf16[1152,128], index: 3, kind: input, shape index: {}]
  %s4 = inlined_call_operand.vmem [shape: f32[1,128], index: 4, kind: input, shape index: {}]
  %s5 = inlined_call_operand.vmem [shape: f32[2,64,128], index: 5, kind: output, shape index: {}]
  %s6 = sld [smem:[#allocation0]]
  $region53: #{residual_block_forward.1} parent=0
    _
  %s8 = ssub.s32 1, %s6
  %s9 = scalar_select 0, %s8, %s6
  loop: start=0, step=1, limit=4
  $region2: #{residual_block_forward.1} parent=0 // loop_pre_header
    _
  $region3: #{residual_block_forward.1} parent=0 // loop_header
    %s11 = sphi 0, %s15
    %p12 = scmp.ge.s32.totalorder %s11, 4
    %s21 = sphi 0, %s23
    %s24 = sphi 0, %s21
    %s25 = sphi 0, %s24
    %s41 = sphi 0, %s25
    %s45 = sphi 0, %s45
    %s47 = sphi 0, %s45
    %s48 = sphi 0, %s47
    %s62 = sphi 0, %s48
    %s66 = sphi 0, %s66
    %s68 = sphi 0, %s66
    %s69 = sphi 0, %s68
    %s83 = sphi 0, %s69
    %s87 = sphi 0, %s87
    %s89 = sphi 0, %s87
    %s90 = sphi 0, %s89
    %s104 = sphi 0, %s90
    %s108 = sphi 0, %s108
    %s110 = sphi 0, %s108
    %s111 = sphi 0, %s110
    %s125 = sphi 0, %s111
    %s131 = sphi 0, %s133
    %s134 = sphi 0, %s131
    %s135 = sphi 0, %s134
    %s151 = sphi 0, %s135
  $region4: #{residual_block_forward.1} parent=0 // loop_header_branch
    %14 = sbr.rel (%p12) target = $region8
  $region5: #{residual_block_forward.1} parent=0 // loop_body
    %s16 = ssub.s32 %s11, 1
    %s17 = ssub.s32 %s11, 2
    %s18 = sadd.s32 %s11, 1
    %s19 = ssub.s32 %s11, %s18
    %p20 = scmp.eq.s32.totalorder %s19, 0
    %s22 = sadd.s32 %s21, 1
    %s23 = scalar_select %p20, %s21, %s22
    %p26 = pneg %p20
    %p27 = scmp.eq.s32.totalorder %s11, 1
    %p28 = por %p26, %p27
    %p29 = scmp.ne.s32.totalorder %s21, %s24
    %p30 = scmp.eq.s32.totalorder %s11, 0
    %p31 = por %p29, %p30
    %p32 = scmp.ne.s32.totalorder %s21, %s24
    %p33 = scmp.eq.s32.totalorder %s16, 1
    %p34 = por %p32, %p33
    %p35 = scmp.ne.s32.totalorder %s24, %s25
    %p36 = scmp.eq.s32.totalorder %s16, 0
    %p37 = por %p35, %p36
    %p38 = scmp.ne.s32.totalorder %s24, %s25
    %p39 = scmp.eq.s32.totalorder %s17, 1
    %p40 = por %p38, %p39
    %p42 = scmp.ne.s32.totalorder %s25, %s41
    %p43 = scmp.eq.s32.totalorder %s17, 0
    %p44 = por %p42, %p43
    %s46 = sadd.s32 %s45, 1
    %p49 = scmp.eq.s32.totalorder %s11, 1
    %p50 = scmp.ne.s32.totalorder %s45, %s47
    %p51 = scmp.eq.s32.totalorder %s11, 0
    %p52 = por %p50, %p51
    %p53 = scmp.ne.s32.totalorder %s45, %s47
    %p54 = scmp.eq.s32.totalorder %s16, 1
    %p55 = por %p53, %p54
    %p56 = scmp.ne.s32.totalorder %s47, %s48
    %p57 = scmp.eq.s32.totalorder %s16, 0
    %p58 = por %p56, %p57
    %p59 = scmp.ne.s32.totalorder %s47, %s48
    %p60 = scmp.eq.s32.totalorder %s17, 1
    %p61 = por %p59, %p60
    %p63 = scmp.ne.s32.totalorder %s48, %s62
    %p64 = scmp.eq.s32.totalorder %s17, 0
    %p65 = por %p63, %p64
    %s67 = sadd.s32 %s66, 1
    %p70 = scmp.eq.s32.totalorder %s11, 1
    %p71 = scmp.ne.s32.totalorder %s66, %s68
    %p72 = scmp.eq.s32.totalorder %s11, 0
    %p73 = por %p71, %p72
    %p74 = scmp.ne.s32.totalorder %s66, %s68
    %p75 = scmp.eq.s32.totalorder %s16, 1
    %p76 = por %p74, %p75
    %p77 = scmp.ne.s32.totalorder %s68, %s69
    %p78 = scmp.eq.s32.totalorder %s16, 0
    %p79 = por %p77, %p78
    %p80 = scmp.ne.s32.totalorder %s68, %s69
    %p81 = scmp.eq.s32.totalorder %s17, 1
    %p82 = por %p80, %p81
    %p84 = scmp.ne.s32.totalorder %s69, %s83
    %p85 = scmp.eq.s32.totalorder %s17, 0
    %p86 = por %p84, %p85
    %s88 = sadd.s32 %s87, 1
    %p91 = scmp.eq.s32.totalorder %s11, 1
    %p92 = scmp.ne.s32.totalorder %s87, %s89
    %p93 = scmp.eq.s32.totalorder %s11, 0
    %p94 = por %p92, %p93
    %p95 = scmp.ne.s32.totalorder %s87, %s89
    %p96 = scmp.eq.s32.totalorder %s16, 1
    %p97 = por %p95, %p96
    %p98 = scmp.ne.s32.totalorder %s89, %s90
    %p99 = scmp.eq.s32.totalorder %s16, 0
    %p100 = por %p98, %p99
    %p101 = scmp.ne.s32.totalorder %s89, %s90
    %p102 = scmp.eq.s32.totalorder %s17, 1
    %p103 = por %p101, %p102
    %p105 = scmp.ne.s32.totalorder %s90, %s104
    %p106 = scmp.eq.s32.totalorder %s17, 0
    %p107 = por %p105, %p106
    %s109 = sadd.s32 %s108, 1
    %p112 = scmp.eq.s32.totalorder %s11, 1
    %p113 = scmp.ne.s32.totalorder %s108, %s110
    %p114 = scmp.eq.s32.totalorder %s11, 0
    %p115 = por %p113, %p114
    %p116 = scmp.ne.s32.totalorder %s108, %s110
    %p117 = scmp.eq.s32.totalorder %s16, 1
    %p118 = por %p116, %p117
    %p119 = scmp.ne.s32.totalorder %s110, %s111
    %p120 = scmp.eq.s32.totalorder %s16, 0
    %p121 = por %p119, %p120
    %p122 = scmp.ne.s32.totalorder %s110, %s111
    %p123 = scmp.eq.s32.totalorder %s17, 1
    %p124 = por %p122, %p123
    %p126 = scmp.ne.s32.totalorder %s111, %s125
    %p127 = scmp.eq.s32.totalorder %s17, 0
    %p128 = por %p126, %p127
    %s129 = ssub.s32 %s11, %s18
    %p130 = scmp.eq.s32.totalorder %s129, 0
    %s132 = sadd.s32 %s131, 1
    %s133 = scalar_select %p130, %s131, %s132
    %p136 = pneg %p130
    %p137 = scmp.eq.s32.totalorder %s11, 1
    %p138 = por %p136, %p137
    %p139 = scmp.ne.s32.totalorder %s131, %s134
    %p140 = scmp.eq.s32.totalorder %s11, 0
    %p141 = por %p139, %p140
    %p142 = scmp.ne.s32.totalorder %s131, %s134
    %p143 = scmp.eq.s32.totalorder %s16, 1
    %p144 = por %p142, %p143
    %p145 = scmp.ne.s32.totalorder %s134, %s135
    %p146 = scmp.eq.s32.totalorder %s16, 0
    %p147 = por %p145, %p146
    %p148 = scmp.ne.s32.totalorder %s134, %s135
    %p149 = scmp.eq.s32.totalorder %s17, 1
    %p150 = por %p148, %p149
    %p152 = scmp.ne.s32.totalorder %s135, %s151
    %p153 = scmp.eq.s32.totalorder %s17, 0
    %p154 = por %p152, %p153
    %p155 = scmp.le.s32.totalorder 1, %s11
    %p156 = scmp.lt.s32.totalorder %s11, 3
    %p157 = pnand %p155, %p156
    %p158 = pneg %p157
    // Predicated region
    $region9: #{residual_block_forward.1} parent=5 // pred_check
      _
    $region10: #{residual_block_forward.1} parent=5 // pred_check_branch
      %160 = sbr.rel (%p157) target = $region12
    $region11: #{residual_block_forward.1} parent=5 // pred_region
      %s161 = ssub.s32 %s11, 1
      // Predicated region
      $region13: #{residual_block_forward.1} parent=11 // pred_check
        %p162 = pneg %p58
      $region14: #{residual_block_forward.1} parent=11 // pred_check_branch
        %164 = sbr.rel (%p162) target = $region16
      $region15: #{residual_block_forward.1} parent=11 // pred_region
        _
      $region16: #{residual_block_forward.1} parent=11 // pred_fallthru
        _
      // Predicated region
      $region17: #{residual_block_forward.1} parent=11 // pred_check
        %p165 = pneg %p79
      $region18: #{residual_block_forward.1} parent=11 // pred_check_branch
        %167 = sbr.rel (%p165) target = $region20
      $region19: #{residual_block_forward.1} parent=11 // pred_region
        _
      $region20: #{residual_block_forward.1} parent=11 // pred_fallthru
        _
      // Predicated region
      $region21: #{residual_block_forward.1} parent=11 // pred_check
        %p168 = pneg %p100
      $region22: #{residual_block_forward.1} parent=11 // pred_check_branch
        %170 = sbr.rel (%p168) target = $region24
      $region23: #{residual_block_forward.1} parent=11 // pred_region
        _
      $region24: #{residual_block_forward.1} parent=11 // pred_fallthru
        _
      // Predicated region
      $region25: #{residual_block_forward.1} parent=11 // pred_check
        %p171 = pneg %p121
      $region26: #{residual_block_forward.1} parent=11 // pred_check_branch
        %173 = sbr.rel (%p171) target = $region28
      $region27: #{residual_block_forward.1} parent=11 // pred_region
        _
      $region28: #{residual_block_forward.1} parent=11 // pred_fallthru
        _
    $region12: #{residual_block_forward.1} parent=5 // pred_fallthru
      _
    %p174 = scmp.lt.s32.totalorder %s11, 2
    // Predicated region
    $region29: #{residual_block_forward.1} parent=5 // pred_check
      %p175 = pneg %p174
    $region30: #{residual_block_forward.1} parent=5 // pred_check_branch
      %177 = sbr.rel (%p175) target = $region32
    $region31: #{residual_block_forward.1} parent=5 // pred_region
      // Predicated region
      $region33: #{residual_block_forward.1} parent=31 // pred_check
        %p178 = pneg %p31
      $region34: #{residual_block_forward.1} parent=31 // pred_check_branch
        %180 = sbr.rel (%p178) target = $region36
      $region35: #{residual_block_forward.1} parent=31 // pred_region
        %p181 = scmp.lt.s32.totalorder %s11, 1
        %s182 = scalar_select %p181, %s11, 1
        %s183 = smul.addr %s182, 8
        %s184 = smul.addr %s183, 4
        %s185 = scalar_lea.vmem %s0, %s184
      $region36: #{residual_block_forward.1} parent=31 // pred_fallthru
        _
    $region32: #{residual_block_forward.1} parent=5 // pred_fallthru
      _
    %p186 = scmp.le.s32.totalorder 1, %s11
    %p187 = scmp.lt.s32.totalorder %s11, 3
    %p188 = pnand %p186, %p187
    %p189 = pneg %p188
    // Predicated region
    $region37: #{residual_block_forward.1} parent=5 // pred_check
      _
    $region38: #{residual_block_forward.1} parent=5 // pred_check_branch
      %191 = sbr.rel (%p188) target = $region40
    $region39: #{residual_block_forward.1} parent=5 // pred_region
      %s192 = ssub.s32 %s11, 1
      %p193 = scmp.lt.s32.totalorder %s16, 1
      %s194 = scalar_select %p193, %s16, 1
      %s195 = smul.addr %s194, 8
      %s196 = smul.addr %s195, 4
      %s197 = scalar_lea.vmem %s0, %s196
      %p198 = pneg %p37
      %p199 = pneg %p34
      %p200 = pneg %p58
      %p201 = pneg %p55
      %p202 = pneg %p79
      %p203 = pneg %p76
      %p204 = pneg %p100
      %p205 = pneg %p97
      %p206 = pneg %p121
      %p207 = pneg %p118
      %p208 = pneg %p147
      %p209 = pneg %p144
      %p210 = scmp.lt.s32.totalorder %s16, 1
      %s211 = scalar_select %p210, %s16, 1
      %s212 = smul.addr %s211, 8
      %s213 = smul.addr %s212, 8
      %s214 = scalar_lea.vmem %s5, %s213
      %p215 = scmp.lt.s32.totalorder %s16, 1
      %s216 = scalar_select %p215, %s16, 1
      %s217 = smul.addr %s216, 8
      %s218 = smul.addr %s217, 4
      %s219 = scalar_lea.vmem %s0, %s218
      %p220 = scmp.lt.s32.totalorder %s16, 1
      %s221 = scalar_select %p220, %s16, 1
      %s222 = smul.addr %s221, 8
      %s223 = smul.addr %s222, 8
      %s224 = scalar_lea.vmem %s5, %s223
      %226 = vst [vmem:[#allocation2] sm:$0xff] 0.0
      %227 = vst [vmem:[#allocation2 + $0x8] sm:$0xff] 0.0
      %228 = vst [vmem:[#allocation2 + $0x50] sm:$0xff] 0.0
      %229 = vst [vmem:[#allocation2 + $0x58] sm:$0xff] 0.0
      %v230 = vld [vmem:[%s219] sm:$0xf]
      %v231 = vld [vmem:[%s219 + $0x4] sm:$0xf]
      %v232 = vld [vmem:[%s219 + $0x8] sm:$0xf]
      %v233 = vld [vmem:[%s219 + $0xc] sm:$0xf]
      %v234 = vld [vmem:[%s219 + $0x10] sm:$0xf]
      %v235 = vld [vmem:[%s219 + $0x14] sm:$0xf]
      %v236 = vld [vmem:[%s219 + $0x18] sm:$0xf]
      %v237 = vld [vmem:[%s219 + $0x1c] sm:$0xf]
      %v238 = vld [vmem:[%s1] sm:$0xff]
      %v239 = vld [vmem:[%s1 + $0x8] sm:$0xff]
      %v240 = vld [vmem:[%s1 + $0x10] sm:$0xff]
      %v241 = vld [vmem:[%s1 + $0x18] sm:$0xff]
      %v242 = vld [vmem:[%s1 + $0x20] sm:$0xff]
      %v243 = vld [vmem:[%s1 + $0x28] sm:$0xff]
      %v244 = vld [vmem:[%s1 + $0x30] sm:$0xff]
      %v245 = vld [vmem:[%s1 + $0x38] sm:$0xff]
      %v246 = vld [vmem:[%s1 + $0x40] sm:$0xff]
      %v247 = vld [vmem:[%s1 + $0x48] sm:$0xff]
      %v248 = vld [vmem:[%s1 + $0x50] sm:$0xff]
      %v249 = vld [vmem:[%s1 + $0x58] sm:$0xff]
      %v250 = vld [vmem:[%s1 + $0x60] sm:$0xff]
      %v251 = vld [vmem:[%s1 + $0x68] sm:$0xff]
      %v252 = vld [vmem:[%s1 + $0x70] sm:$0xff]
      %v253 = vld [vmem:[%s1 + $0x78] sm:$0xff]
      %v254 = vld [vmem:[%s2] sm:$0x3]
      %v256 = vlaneseq
      %v257 = vshrl.u32 %v256, 7
      %v258 = vsub.s32 0, %v257
      %v259 = vrot.slane %v254, %v258
      %v260 = vlaneseq
      %v261 = vshrl.u32 %v260, 7
      %v262 = vsub.s32 1, %v261
      %v263 = vrot.slane %v254, %v262
      %v274 = vunpack.c.l.b16 %v230
      %v275 = vunpack.c.l.b16 %v231
      %v276 = vunpack.c.l.b16 %v232
      %v277 = vunpack.c.l.b16 %v233
      %v278 = vunpack.c.l.b16 %v234
      %v279 = vunpack.c.l.b16 %v235
      %v280 = vunpack.c.l.b16 %v236
      %v281 = vunpack.c.l.b16 %v237
      %v282 = vpack.c.b16 %v275, %v274
      %v283 = vpack.c.b16 %v277, %v276
      %v284 = vpack.c.b16 %v279, %v278
      %v285 = vpack.c.b16 %v281, %v280
      %v306 = vunpack.c.l.b16 %v238
      %v307 = vunpack.c.h.b16 %v238
      %v308 = vunpack.c.l.b16 %v239
      %v309 = vunpack.c.h.b16 %v239
      %v310 = vunpack.c.l.b16 %v240
      %v311 = vunpack.c.h.b16 %v240
      %v312 = vunpack.c.l.b16 %v241
      %v313 = vunpack.c.h.b16 %v241
      %v314 = vunpack.c.l.b16 %v242
      %v315 = vunpack.c.h.b16 %v242
      %v316 = vunpack.c.l.b16 %v243
      %v317 = vunpack.c.h.b16 %v243
      %v318 = vunpack.c.l.b16 %v244
      %v319 = vunpack.c.h.b16 %v244
      %v320 = vunpack.c.l.b16 %v245
      %v321 = vunpack.c.h.b16 %v245
      %v322 = vunpack.c.l.b16 %v246
      %v323 = vunpack.c.h.b16 %v246
      %v324 = vunpack.c.l.b16 %v247
      %v325 = vunpack.c.h.b16 %v247
      %v326 = vunpack.c.l.b16 %v248
      %v327 = vunpack.c.h.b16 %v248
      %v328 = vunpack.c.l.b16 %v249
      %v329 = vunpack.c.h.b16 %v249
      %v330 = vunpack.c.l.b16 %v250
      %v331 = vunpack.c.h.b16 %v250
      %v332 = vunpack.c.l.b16 %v251
      %v333 = vunpack.c.h.b16 %v251
      %v334 = vunpack.c.l.b16 %v252
      %v335 = vunpack.c.h.b16 %v252
      %v336 = vunpack.c.l.b16 %v253
      %v337 = vunpack.c.h.b16 %v253
      %v338 = vpack.c.b16 %v308, %v306
      %v339 = vpack.c.b16 %v309, %v307
      %v340 = vpack.c.b16 %v312, %v310
      %v341 = vpack.c.b16 %v313, %v311
      %v342 = vpack.c.b16 %v316, %v314
      %v343 = vpack.c.b16 %v317, %v315
      %v344 = vpack.c.b16 %v320, %v318
      %v345 = vpack.c.b16 %v321, %v319
      %v346 = vpack.c.b16 %v324, %v322
      %v347 = vpack.c.b16 %v325, %v323
      %v348 = vpack.c.b16 %v328, %v326
      %v349 = vpack.c.b16 %v329, %v327
      %v350 = vpack.c.b16 %v332, %v330
      %v351 = vpack.c.b16 %v333, %v331
      %v352 = vpack.c.b16 %v336, %v334
      %v353 = vpack.c.b16 %v337, %v335
      %370 = vmatprep.subr.bf16.mxu0 %v353
      %371 = vmatpush1.bf16.msra.mxu0 %v352
      %372 = vmatprep.subr.bf16.mxu0 %v351
      %373 = vmatpush1.bf16.msra.mxu0 %v350
      %374 = vmatprep.subr.bf16.mxu0 %v349
      %375 = vmatpush1.bf16.msra.mxu0 %v348
      %376 = vmatprep.subr.bf16.mxu0 %v347
      %377 = vmatpush1.bf16.msra.mxu0 %v346
      %378 = vmatprep.subr.bf16.mxu0 %v345
      %379 = vmatpush1.bf16.msra.mxu0 %v344
      %380 = vmatprep.subr.bf16.mxu0 %v343
      %381 = vmatpush1.bf16.msra.mxu0 %v342
      %382 = vmatprep.subr.bf16.mxu0 %v341
      %383 = vmatpush1.bf16.msra.mxu0 %v340
      %384 = vmatprep.subr.bf16.mxu0 %v339
      %385 = vmatpush1.bf16.msra.mxu0 %v338
      %386 = vmatprep.subr.bf16.mxu0 0
      %387 = vmatpush2.bf16.msra.mxu0 0
      %388 = vmatprep.subr.bf16.mxu0 0
      %389 = vmatpush2.bf16.msra.mxu0 0
      %390 = vmatprep.subr.bf16.mxu0 0
      %391 = vmatpush2.bf16.msra.mxu0 0
      %392 = vmatprep.subr.bf16.mxu0 0
      %393 = vmatpush2.bf16.msra.mxu0 0
      %394 = vmatprep.subr.bf16.mxu0 0
      %395 = vmatpush2.bf16.msra.mxu0 0
      %396 = vmatprep.subr.bf16.mxu0 0
      %397 = vmatpush2.bf16.msra.mxu0 0
      %398 = vmatprep.subr.bf16.mxu0 0
      %399 = vmatpush2.bf16.msra.mxu0 0
      %400 = vmatprep.subr.bf16.mxu0 0
      %401 = vmatpush2.bf16.msra.mxu0 0
      %402 = vmatprep.mubr.bf16.mxu0 0
      %403 = vmatmul.mubr.bf16.gmra.mxu0 %v282
      %v404 = vpop.f32.mrf.mxu0
      %v405 = vadd.f32 %v259, %v404
      %v406 = vpop.f32.mrf.mxu0
      %v407 = vadd.f32 %v263, %v406
      %v408 = vpop.f32.mrf.mxu0
      %v409 = vadd.f32 %v259, %v408
      %v410 = vpop.f32.mrf.mxu0
      %v411 = vadd.f32 %v263, %v410
      %412 = vmatprep.mubr.bf16.mxu0 0
      %413 = vmatmul.mubr.bf16.gmra.mxu0 %v283
      %v414 = vpop.f32.mrf.mxu0
      %v415 = vadd.f32 %v259, %v414
      %v416 = vpop.f32.mrf.mxu0
      %v417 = vadd.f32 %v263, %v416
      %v418 = vpop.f32.mrf.mxu0
      %v419 = vadd.f32 %v259, %v418
      %v420 = vpop.f32.mrf.mxu0
      %v421 = vadd.f32 %v263, %v420
      %422 = vmatprep.mubr.bf16.mxu0 0
      %423 = vmatmul.mubr.bf16.gmra.mxu0 %v284
      %v424 = vpop.f32.mrf.mxu0
      %v425 = vadd.f32 %v259, %v424
      %v426 = vpop.f32.mrf.mxu0
      %v427 = vadd.f32 %v263, %v426
      %v428 = vpop.f32.mrf.mxu0
      %v429 = vadd.f32 %v259, %v428
      %v430 = vpop.f32.mrf.mxu0
      %v431 = vadd.f32 %v263, %v430
      %432 = vmatprep.mubr.bf16.mxu0 0
      %433 = vmatmul.mubr.bf16.gmra.mxu0 %v285
      %v434 = vpop.f32.mrf.mxu0
      %v435 = vadd.f32 %v259, %v434
      %v436 = vpop.f32.mrf.mxu0
      %v437 = vadd.f32 %v263, %v436
      %v438 = vpop.f32.mrf.mxu0
      %v439 = vadd.f32 %v259, %v438
      %v440 = vpop.f32.mrf.mxu0
      %v441 = vadd.f32 %v263, %v440
      %442 = vdwg.mxu0
      %v443 = vmax.f32 %v405, 0.0
      %v444 = vmax.f32 %v409, 0.0
      %v445 = vmax.f32 %v415, 0.0
      %v446 = vmax.f32 %v419, 0.0
      %v447 = vmax.f32 %v425, 0.0
      %v448 = vmax.f32 %v429, 0.0
      %v449 = vmax.f32 %v435, 0.0
      %v450 = vmax.f32 %v439, 0.0
      %v451 = vlaneseq
      %v452 = vshrl.u32 %v451, 7
      %v453 = vadd.s32 %v452, 8
      %v454 = vadd.s32 %v452, 16
      %v455 = vadd.s32 %v452, 24
      %v456 = vadd.s32 %v452, 32
      %v457 = vadd.s32 %v452, 40
      %v458 = vadd.s32 %v452, 48
      %v459 = vadd.s32 %v452, 56
      %vm460 = vcmp.lt.s32.totalorder %v452, 0
      %v461 = vsub.s32 0, %v452
      %v462 = vsel %vm460, %v461, %v452
      %v463 = vshrl.u32 %v462, 3
      %v464 = vand.u32 %v462, 7
      %v465 = vsub.s32 0, %v464
      %v466 = vsel %vm460, %v465, %v464
      %vm467 = vcmp.lt.s32.totalorder %v453, 0
      %v468 = vsub.s32 0, %v453
      %v469 = vsel %vm467, %v468, %v453
      %v470 = vshrl.u32 %v469, 3
      %v471 = vand.u32 %v469, 7
      %v472 = vsub.s32 0, %v471
      %v473 = vsel %vm467, %v472, %v471
      %vm474 = vcmp.lt.s32.totalorder %v454, 0
      %v475 = vsub.s32 0, %v454
      %v476 = vsel %vm474, %v475, %v454
      %v477 = vshrl.u32 %v476, 3
      %v478 = vand.u32 %v476, 7
      %v479 = vsub.s32 0, %v478
      %v480 = vsel %vm474, %v479, %v478
      %vm481 = vcmp.lt.s32.totalorder %v455, 0
      %v482 = vsub.s32 0, %v455
      %v483 = vsel %vm481, %v482, %v455
      %v484 = vshrl.u32 %v483, 3
      %v485 = vand.u32 %v483, 7
      %v486 = vsub.s32 0, %v485
      %v487 = vsel %vm481, %v486, %v485
      %vm488 = vcmp.lt.s32.totalorder %v456, 0
      %v489 = vsub.s32 0, %v456
      %v490 = vsel %vm488, %v489, %v456
      %v491 = vshrl.u32 %v490, 3
      %v492 = vand.u32 %v490, 7
      %v493 = vsub.s32 0, %v492
      %v494 = vsel %vm488, %v493, %v492
      %vm495 = vcmp.lt.s32.totalorder %v457, 0
      %v496 = vsub.s32 0, %v457
      %v497 = vsel %vm495, %v496, %v457
      %v498 = vshrl.u32 %v497, 3
      %v499 = vand.u32 %v497, 7
      %v500 = vsub.s32 0, %v499
      %v501 = vsel %vm495, %v500, %v499
      %vm502 = vcmp.lt.s32.totalorder %v458, 0
      %v503 = vsub.s32 0, %v458
      %v504 = vsel %vm502, %v503, %v458
      %v505 = vshrl.u32 %v504, 3
      %v506 = vand.u32 %v504, 7
      %v507 = vsub.s32 0, %v506
      %v508 = vsel %vm502, %v507, %v506
      %vm509 = vcmp.lt.s32.totalorder %v459, 0
      %v510 = vsub.s32 0, %v459
      %v511 = vsel %vm509, %v510, %v459
      %v512 = vshrl.u32 %v511, 3
      %v513 = vand.u32 %v511, 7
      %v514 = vsub.s32 0, %v513
      %v515 = vsel %vm509, %v514, %v513
      %vm516 = vcmp.ne.s32.totalorder %v466, 0
      %vm517 = vcmp.ne.s32.totalorder %v473, 0
      %vm518 = vcmp.ne.s32.totalorder %v480, 0
      %vm519 = vcmp.ne.s32.totalorder %v487, 0
      %vm520 = vcmp.ne.s32.totalorder %v494, 0
      %vm521 = vcmp.ne.s32.totalorder %v501, 0
      %vm522 = vcmp.ne.s32.totalorder %v508, 0
      %vm523 = vcmp.ne.s32.totalorder %v515, 0
      %vm524 = vcmp.lt.s32.totalorder %v466, 0
      %vm525 = vcmp.lt.s32.totalorder %v473, 0
      %vm526 = vcmp.lt.s32.totalorder %v480, 0
      %vm527 = vcmp.lt.s32.totalorder %v487, 0
      %vm528 = vcmp.lt.s32.totalorder %v494, 0
      %vm529 = vcmp.lt.s32.totalorder %v501, 0
      %vm530 = vcmp.lt.s32.totalorder %v508, 0
      %vm531 = vcmp.lt.s32.totalorder %v515, 0
      %vm532 = vmand %vm524, %vm516
      %vm533 = vmand %vm525, %vm517
      %vm534 = vmand %vm526, %vm518
      %vm535 = vmand %vm527, %vm519
      %vm536 = vmand %vm528, %vm520
      %vm537 = vmand %vm529, %vm521
      %vm538 = vmand %vm530, %vm522
      %vm539 = vmand %vm531, %vm523
      %v540 = vadd.s32 %v466, 8
      %v541 = vadd.s32 %v473, 8
      %v542 = vadd.s32 %v480, 8
      %v543 = vadd.s32 %v487, 8
      %v544 = vadd.s32 %v494, 8
      %v545 = vadd.s32 %v501, 8
      %v546 = vadd.s32 %v508, 8
      %v547 = vadd.s32 %v515, 8
      %v548 = vsel %vm532, %v540, %v466
      %v549 = vsel %vm533, %v541, %v473
      %v550 = vsel %vm534, %v542, %v480
      %v551 = vsel %vm535, %v543, %v487
      %v552 = vsel %vm536, %v544, %v494
      %v553 = vsel %vm537, %v545, %v501
      %v554 = vsel %vm538, %v546, %v508
      %v555 = vsel %vm539, %v547, %v515
      %vm556 = vcmp.ge.s32.totalorder %v548, 1
      %vm557 = vcmp.ge.s32.totalorder %v549, 1
      %vm558 = vcmp.ge.s32.totalorder %v550, 1
      %vm559 = vcmp.ge.s32.totalorder %v551, 1
      %vm560 = vcmp.ge.s32.totalorder %v552, 1
      %vm561 = vcmp.ge.s32.totalorder %v553, 1
      %vm562 = vcmp.ge.s32.totalorder %v554, 1
      %vm563 = vcmp.ge.s32.totalorder %v555, 1
      %v564 = vsel %vm556, 1, 0
      %v565 = vsel %vm557, 1, 0
      %v566 = vsel %vm558, 1, 0
      %v567 = vsel %vm559, 1, 0
      %v568 = vsel %vm560, 1, 0
      %v569 = vsel %vm561, 1, 0
      %v570 = vsel %vm562, 1, 0
      %v571 = vsel %vm563, 1, 0
      %v572 = vcvt.s32.f32 %v564
      %v573 = vcvt.s32.f32 %v565
      %v574 = vcvt.s32.f32 %v566
      %v575 = vcvt.s32.f32 %v567
      %v576 = vcvt.s32.f32 %v568
      %v577 = vcvt.s32.f32 %v569
      %v578 = vcvt.s32.f32 %v570
      %v579 = vcvt.s32.f32 %v571
      %vm580 = vcmp.lt.s32.totalorder %v548, 7
      %vm581 = vcmp.lt.s32.totalorder %v549, 7
      %vm582 = vcmp.lt.s32.totalorder %v550, 7
      %vm583 = vcmp.lt.s32.totalorder %v551, 7
      %vm584 = vcmp.lt.s32.totalorder %v552, 7
      %vm585 = vcmp.lt.s32.totalorder %v553, 7
      %vm586 = vcmp.lt.s32.totalorder %v554, 7
      %vm587 = vcmp.lt.s32.totalorder %v555, 7
      %v588 = vsel %vm580, 1, 0
      %v589 = vsel %vm581, 1, 0
      %v590 = vsel %vm582, 1, 0
      %v591 = vsel %vm583, 1, 0
      %v592 = vsel %vm584, 1, 0
      %v593 = vsel %vm585, 1, 0
      %v594 = vsel %vm586, 1, 0
      %v595 = vsel %vm587, 1, 0
      %v596 = vcvt.s32.f32 %v588
      %v597 = vcvt.s32.f32 %v589
      %v598 = vcvt.s32.f32 %v590
      %v599 = vcvt.s32.f32 %v591
      %v600 = vcvt.s32.f32 %v592
      %v601 = vcvt.s32.f32 %v593
      %v602 = vcvt.s32.f32 %v594
      %v603 = vcvt.s32.f32 %v595
      %604 = vst [vmem:[#allocation2 + $0x10] sm:$0xff] %v443
      %605 = vst [vmem:[#allocation2 + $0x18] sm:$0xff] %v444
      %606 = vst [vmem:[#allocation2 + $0x20] sm:$0xff] %v445
      %607 = vst [vmem:[#allocation2 + $0x28] sm:$0xff] %v446
      %608 = vst [vmem:[#allocation2 + $0x30] sm:$0xff] %v447
      %609 = vst [vmem:[#allocation2 + $0x38] sm:$0xff] %v448
      %610 = vst [vmem:[#allocation2 + $0x40] sm:$0xff] %v449
      %611 = vst [vmem:[#allocation2 + $0x48] sm:$0xff] %v450
      %v612 = vld [vmem:[#allocation2 + $0x7] sm:$0xff]
      %v613 = vld [vmem:[#allocation2 + $0xf] sm:$0xff]
      %v614 = vld [vmem:[#allocation2 + $0x17] sm:$0xff]
      %v615 = vld [vmem:[#allocation2 + $0x1f] sm:$0xff]
      %v616 = vld [vmem:[#allocation2 + $0x27] sm:$0xff]
      %v617 = vld [vmem:[#allocation2 + $0x2f] sm:$0xff]
      %v618 = vld [vmem:[#allocation2 + $0x37] sm:$0xff]
      %v619 = vld [vmem:[#allocation2 + $0x3f] sm:$0xff]
      %v620 = vmul.f32 %v612, %v572
      %v621 = vmul.f32 %v613, %v573
      %v622 = vmul.f32 %v614, %v574
      %v623 = vmul.f32 %v615, %v575
      %v624 = vmul.f32 %v616, %v576
      %v625 = vmul.f32 %v617, %v577
      %v626 = vmul.f32 %v618, %v578
      %v627 = vmul.f32 %v619, %v579
      %v628 = vpack.c.bf16 %v621, %v620
      %v629 = vpack.c.bf16 %v623, %v622
      %v630 = vpack.c.bf16 %v625, %v624
      %v631 = vpack.c.bf16 %v627, %v626
      %v632 = vld [vmem:[%s3] sm:$0xf]
      %v633 = vld [vmem:[%s3 + $0x4] sm:$0xf]
      %v634 = vld [vmem:[%s3 + $0x8] sm:$0xf]
      %v635 = vld [vmem:[%s3 + $0xc] sm:$0xf]
      %v636 = vld [vmem:[%s3 + $0x10] sm:$0xf]
      %v637 = vld [vmem:[%s3 + $0x14] sm:$0xf]
      %v638 = vld [vmem:[%s3 + $0x18] sm:$0xf]
      %v639 = vld [vmem:[%s3 + $0x1c] sm:$0xf]
      %v640 = vld [vmem:[%s3 + $0x20] sm:$0xf]
      %v641 = vld [vmem:[%s3 + $0x24] sm:$0xf]
      %v642 = vld [vmem:[%s3 + $0x28] sm:$0xf]
      %v643 = vld [vmem:[%s3 + $0x2c] sm:$0xf]
      %v644 = vld [vmem:[%s3 + $0x30] sm:$0xf]
      %v645 = vld [vmem:[%s3 + $0x34] sm:$0xf]
      %v646 = vld [vmem:[%s3 + $0x38] sm:$0xf]
      %v647 = vld [vmem:[%s3 + $0x3c] sm:$0xf]
      %v648 = vld [vmem:[#allocation2 + $0x8] sm:$0xff]
      %v649 = vld [vmem:[#allocation2 + $0x10] sm:$0xff]
      %v650 = vld [vmem:[#allocation2 + $0x18] sm:$0xff]
      %v651 = vld [vmem:[#allocation2 + $0x20] sm:$0xff]
      %v652 = vld [vmem:[#allocation2 + $0x28] sm:$0xff]
      %v653 = vld [vmem:[#allocation2 + $0x30] sm:$0xff]
      %v654 = vld [vmem:[#allocation2 + $0x38] sm:$0xff]
      %v655 = vld [vmem:[#allocation2 + $0x40] sm:$0xff]
      %v656 = vpack.c.bf16 %v649, %v648
      %v657 = vpack.c.bf16 %v651, %v650
      %v658 = vpack.c.bf16 %v653, %v652
      %v659 = vpack.c.bf16 %v655, %v654
      %v660 = vld [vmem:[%s3 + $0x40] sm:$0xf]
      %v661 = vld [vmem:[%s3 + $0x44] sm:$0xf]
      %v662 = vld [vmem:[%s3 + $0x48] sm:$0xf]
      %v663 = vld [vmem:[%s3 + $0x4c] sm:$0xf]
      %v664 = vld [vmem:[%s3 + $0x50] sm:$0xf]
      %v665 = vld [vmem:[%s3 + $0x54] sm:$0xf]
      %v666 = vld [vmem:[%s3 + $0x58] sm:$0xf]
      %v667 = vld [vmem:[%s3 + $0x5c] sm:$0xf]
      %v668 = vld [vmem:[%s3 + $0x60] sm:$0xf]
      %v669 = vld [vmem:[%s3 + $0x64] sm:$0xf]
      %v670 = vld [vmem:[%s3 + $0x68] sm:$0xf]
      %v671 = vld [vmem:[%s3 + $0x6c] sm:$0xf]
      %v672 = vld [vmem:[%s3 + $0x70] sm:$0xf]
      %v673 = vld [vmem:[%s3 + $0x74] sm:$0xf]
      %v674 = vld [vmem:[%s3 + $0x78] sm:$0xf]
      %v675 = vld [vmem:[%s3 + $0x7c] sm:$0xf]
      %v692 = vunpack.c.l.b16 %v660
      %v693 = vunpack.c.l.b16 %v661
      %v694 = vunpack.c.l.b16 %v662
      %v695 = vunpack.c.l.b16 %v663
      %v696 = vunpack.c.l.b16 %v664
      %v697 = vunpack.c.l.b16 %v665
      %v698 = vunpack.c.l.b16 %v666
      %v699 = vunpack.c.l.b16 %v667
      %v700 = vunpack.c.l.b16 %v668
      %v701 = vunpack.c.l.b16 %v669
      %v702 = vunpack.c.l.b16 %v670
      %v703 = vunpack.c.l.b16 %v671
      %v704 = vunpack.c.l.b16 %v672
      %v705 = vunpack.c.l.b16 %v673
      %v706 = vunpack.c.l.b16 %v674
      %v707 = vunpack.c.l.b16 %v675
      %v708 = vpack.c.b16 %v693, %v692
      %v709 = vpack.c.b16 %v695, %v694
      %v710 = vpack.c.b16 %v697, %v696
      %v711 = vpack.c.b16 %v699, %v698
      %v712 = vpack.c.b16 %v701, %v700
      %v713 = vpack.c.b16 %v703, %v702
      %v714 = vpack.c.b16 %v705, %v704
      %v715 = vpack.c.b16 %v707, %v706
      %724 = vmatprep.subr.bf16.mxu0 0
      %725 = vmatpush1.bf16.msra.mxu0 %v715
      %726 = vmatprep.subr.bf16.mxu0 0
      %727 = vmatpush1.bf16.msra.mxu0 %v714
      %728 = vmatprep.subr.bf16.mxu0 0
      %729 = vmatpush1.bf16.msra.mxu0 %v713
      %730 = vmatprep.subr.bf16.mxu0 0
      %731 = vmatpush1.bf16.msra.mxu0 %v712
      %732 = vmatprep.subr.bf16.mxu0 0
      %733 = vmatpush1.bf16.msra.mxu0 %v711
      %734 = vmatprep.subr.bf16.mxu0 0
      %735 = vmatpush1.bf16.msra.mxu0 %v710
      %736 = vmatprep.subr.bf16.mxu0 0
      %737 = vmatpush1.bf16.msra.mxu0 %v709
      %738 = vmatprep.subr.bf16.mxu0 0
      %739 = vmatpush1.bf16.msra.mxu0 %v708
      %740 = vmatprep.subr.bf16.mxu0 0
      %741 = vmatpush2.bf16.msra.mxu0 0
      %742 = vmatprep.subr.bf16.mxu0 0
      %743 = vmatpush2.bf16.msra.mxu0 0
      %744 = vmatprep.subr.bf16.mxu0 0
      %745 = vmatpush2.bf16.msra.mxu0 0
      %746 = vmatprep.subr.bf16.mxu0 0
      %747 = vmatpush2.bf16.msra.mxu0 0
      %748 = vmatprep.subr.bf16.mxu0 0
      %749 = vmatpush2.bf16.msra.mxu0 0
      %750 = vmatprep.subr.bf16.mxu0 0
      %751 = vmatpush2.bf16.msra.mxu0 0
      %752 = vmatprep.subr.bf16.mxu0 0
      %753 = vmatpush2.bf16.msra.mxu0 0
      %754 = vmatprep.subr.bf16.mxu0 0
      %755 = vmatpush2.bf16.msra.mxu0 0
      %756 = vmatprep.mubr.bf16.mxu0 0
      %757 = vmatmul.mubr.bf16.gmra.mxu0 %v656
      %v758 = vpop.f32.mrf.mxu0
      %v759 = vadd.f32 0.0, %v758
      %v760 = vpop.f32.mrf.mxu0
      %v761 = vpop.f32.mrf.mxu0
      %v762 = vadd.f32 0.0, %v761
      %v763 = vpop.f32.mrf.mxu0
      %764 = vmatprep.mubr.bf16.mxu0 0
      %765 = vmatmul.mubr.bf16.gmra.mxu0 %v657
      %v766 = vpop.f32.mrf.mxu0
      %v767 = vadd.f32 0.0, %v766
      %v768 = vpop.f32.mrf.mxu0
      %v769 = vpop.f32.mrf.mxu0
      %v770 = vadd.f32 0.0, %v769
      %v771 = vpop.f32.mrf.mxu0
      %772 = vmatprep.mubr.bf16.mxu0 0
      %773 = vmatmul.mubr.bf16.gmra.mxu0 %v658
      %v774 = vpop.f32.mrf.mxu0
      %v775 = vadd.f32 0.0, %v774
      %v776 = vpop.f32.mrf.mxu0
      %v777 = vpop.f32.mrf.mxu0
      %v778 = vadd.f32 0.0, %v777
      %v779 = vpop.f32.mrf.mxu0
      %780 = vmatprep.mubr.bf16.mxu0 0
      %781 = vmatmul.mubr.bf16.gmra.mxu0 %v659
      %v782 = vpop.f32.mrf.mxu0
      %v783 = vadd.f32 0.0, %v782
      %v784 = vpop.f32.mrf.mxu0
      %v785 = vpop.f32.mrf.mxu0
      %v786 = vadd.f32 0.0, %v785
      %v787 = vpop.f32.mrf.mxu0
      %788 = vdwg.mxu0
      %v805 = vunpack.c.l.b16 %v632
      %v806 = vunpack.c.l.b16 %v633
      %v807 = vunpack.c.l.b16 %v634
      %v808 = vunpack.c.l.b16 %v635
      %v809 = vunpack.c.l.b16 %v636
      %v810 = vunpack.c.l.b16 %v637
      %v811 = vunpack.c.l.b16 %v638
      %v812 = vunpack.c.l.b16 %v639
      %v813 = vunpack.c.l.b16 %v640
      %v814 = vunpack.c.l.b16 %v641
      %v815 = vunpack.c.l.b16 %v642
      %v816 = vunpack.c.l.b16 %v643
      %v817 = vunpack.c.l.b16 %v644
      %v818 = vunpack.c.l.b16 %v645
      %v819 = vunpack.c.l.b16 %v646
      %v820 = vunpack.c.l.b16 %v647
      %v821 = vpack.c.b16 %v806, %v805
      %v822 = vpack.c.b16 %v808, %v807
      %v823 = vpack.c.b16 %v810, %v809
      %v824 = vpack.c.b16 %v812, %v811
      %v825 = vpack.c.b16 %v814, %v813
      %v826 = vpack.c.b16 %v816, %v815
      %v827 = vpack.c.b16 %v818, %v817
      %v828 = vpack.c.b16 %v820, %v819
      %837 = vmatprep.subr.bf16.mxu0 0
      %838 = vmatpush1.bf16.msra.mxu0 %v828
      %839 = vmatprep.subr.bf16.mxu0 0
      %840 = vmatpush1.bf16.msra.mxu0 %v827
      %841 = vmatprep.subr.bf16.mxu0 0
      %842 = vmatpush1.bf16.msra.mxu0 %v826
      %843 = vmatprep.subr.bf16.mxu0 0
      %844 = vmatpush1.bf16.msra.mxu0 %v825
      %845 = vmatprep.subr.bf16.mxu0 0
      %846 = vmatpush1.bf16.msra.mxu0 %v824
      %847 = vmatprep.subr.bf16.mxu0 0
      %848 = vmatpush1.bf16.msra.mxu0 %v823
      %849 = vmatprep.subr.bf16.mxu0 0
      %850 = vmatpush1.bf16.msra.mxu0 %v822
      %851 = vmatprep.subr.bf16.mxu0 0
      %852 = vmatpush1.bf16.msra.mxu0 %v821
      %853 = vmatprep.subr.bf16.mxu0 0
      %854 = vmatpush2.bf16.msra.mxu0 0
      %855 = vmatprep.subr.bf16.mxu0 0
      %856 = vmatpush2.bf16.msra.mxu0 0
      %857 = vmatprep.subr.bf16.mxu0 0
      %858 = vmatpush2.bf16.msra.mxu0 0
      %859 = vmatprep.subr.bf16.mxu0 0
      %860 = vmatpush2.bf16.msra.mxu0 0
      %861 = vmatprep.subr.bf16.mxu0 0
      %862 = vmatpush2.bf16.msra.mxu0 0
      %863 = vmatprep.subr.bf16.mxu0 0
      %864 = vmatpush2.bf16.msra.mxu0 0
      %865 = vmatprep.subr.bf16.mxu0 0
      %866 = vmatpush2.bf16.msra.mxu0 0
      %867 = vmatprep.subr.bf16.mxu0 0
      %868 = vmatpush2.bf16.msra.mxu0 0
      %869 = vmatprep.mubr.bf16.mxu0 0
      %870 = vmatmul.mubr.bf16.gmra.mxu0 %v628
      %v871 = vpop.f32.mrf.mxu0
      %v872 = vadd.f32 %v759, %v871
      %v873 = vpop.f32.mrf.mxu0
      %v874 = vpop.f32.mrf.mxu0
      %v875 = vadd.f32 %v762, %v874
      %v876 = vpop.f32.mrf.mxu0
      %877 = vmatprep.mubr.bf16.mxu0 0
      %878 = vmatmul.mubr.bf16.gmra.mxu0 %v629
      %v879 = vpop.f32.mrf.mxu0
      %v880 = vadd.f32 %v767, %v879
      %v881 = vpop.f32.mrf.mxu0
      %v882 = vpop.f32.mrf.mxu0
      %v883 = vadd.f32 %v770, %v882
      %v884 = vpop.f32.mrf.mxu0
      %885 = vmatprep.mubr.bf16.mxu0 0
      %886 = vmatmul.mubr.bf16.gmra.mxu0 %v630
      %v887 = vpop.f32.mrf.mxu0
      %v888 = vadd.f32 %v775, %v887
      %v889 = vpop.f32.mrf.mxu0
      %v890 = vpop.f32.mrf.mxu0
      %v891 = vadd.f32 %v778, %v890
      %v892 = vpop.f32.mrf.mxu0
      %893 = vmatprep.mubr.bf16.mxu0 0
      %894 = vmatmul.mubr.bf16.gmra.mxu0 %v631
      %v895 = vpop.f32.mrf.mxu0
      %v896 = vadd.f32 %v783, %v895
      %v897 = vpop.f32.mrf.mxu0
      %v898 = vpop.f32.mrf.mxu0
      %v899 = vadd.f32 %v786, %v898
      %v900 = vpop.f32.mrf.mxu0
      %901 = vdwg.mxu0
      %v902 = vld [vmem:[#allocation2 + $0x9] sm:$0xff]
      %v903 = vld [vmem:[#allocation2 + $0x11] sm:$0xff]
      %v904 = vld [vmem:[#allocation2 + $0x19] sm:$0xff]
      %v905 = vld [vmem:[#allocation2 + $0x21] sm:$0xff]
      %v906 = vld [vmem:[#allocation2 + $0x29] sm:$0xff]
      %v907 = vld [vmem:[#allocation2 + $0x31] sm:$0xff]
      %v908 = vld [vmem:[#allocation2 + $0x39] sm:$0xff]
      %v909 = vld [vmem:[#allocation2 + $0x41] sm:$0xff]
      %v910 = vmul.f32 %v902, %v596
      %v911 = vmul.f32 %v903, %v597
      %v912 = vmul.f32 %v904, %v598
      %v913 = vmul.f32 %v905, %v599
      %v914 = vmul.f32 %v906, %v600
      %v915 = vmul.f32 %v907, %v601
      %v916 = vmul.f32 %v908, %v602
      %v917 = vmul.f32 %v909, %v603
      %v918 = vpack.c.bf16 %v911, %v910
      %v919 = vpack.c.bf16 %v913, %v912
      %v920 = vpack.c.bf16 %v915, %v914
      %v921 = vpack.c.bf16 %v917, %v916
      %v922 = vld [vmem:[%s3 + $0x80] sm:$0xf]
      %v923 = vld [vmem:[%s3 + $0x84] sm:$0xf]
      %v924 = vld [vmem:[%s3 + $0x88] sm:$0xf]
      %v925 = vld [vmem:[%s3 + $0x8c] sm:$0xf]
      %v926 = vld [vmem:[%s3 + $0x90] sm:$0xf]
      %v927 = vld [vmem:[%s3 + $0x94] sm:$0xf]
      %v928 = vld [vmem:[%s3 + $0x98] sm:$0xf]
      %v929 = vld [vmem:[%s3 + $0x9c] sm:$0xf]
      %v930 = vld [vmem:[%s3 + $0xa0] sm:$0xf]
      %v931 = vld [vmem:[%s3 + $0xa4] sm:$0xf]
      %v932 = vld [vmem:[%s3 + $0xa8] sm:$0xf]
      %v933 = vld [vmem:[%s3 + $0xac] sm:$0xf]
      %v934 = vld [vmem:[%s3 + $0xb0] sm:$0xf]
      %v935 = vld [vmem:[%s3 + $0xb4] sm:$0xf]
      %v936 = vld [vmem:[%s3 + $0xb8] sm:$0xf]
      %v937 = vld [vmem:[%s3 + $0xbc] sm:$0xf]
      %v954 = vunpack.c.l.b16 %v922
      %v955 = vunpack.c.l.b16 %v923
      %v956 = vunpack.c.l.b16 %v924
      %v957 = vunpack.c.l.b16 %v925
      %v958 = vunpack.c.l.b16 %v926
      %v959 = vunpack.c.l.b16 %v927
      %v960 = vunpack.c.l.b16 %v928
      %v961 = vunpack.c.l.b16 %v929
      %v962 = vunpack.c.l.b16 %v930
      %v963 = vunpack.c.l.b16 %v931
      %v964 = vunpack.c.l.b16 %v932
      %v965 = vunpack.c.l.b16 %v933
      %v966 = vunpack.c.l.b16 %v934
      %v967 = vunpack.c.l.b16 %v935
      %v968 = vunpack.c.l.b16 %v936
      %v969 = vunpack.c.l.b16 %v937
      %v970 = vpack.c.b16 %v955, %v954
      %v971 = vpack.c.b16 %v957, %v956
      %v972 = vpack.c.b16 %v959, %v958
      %v973 = vpack.c.b16 %v961, %v960
      %v974 = vpack.c.b16 %v963, %v962
      %v975 = vpack.c.b16 %v965, %v964
      %v976 = vpack.c.b16 %v967, %v966
      %v977 = vpack.c.b16 %v969, %v968
      %986 = vmatprep.subr.bf16.mxu0 0
      %987 = vmatpush1.bf16.msra.mxu0 %v977
      %988 = vmatprep.subr.bf16.mxu0 0
      %989 = vmatpush1.bf16.msra.mxu0 %v976
      %990 = vmatprep.subr.bf16.mxu0 0
      %991 = vmatpush1.bf16.msra.mxu0 %v975
      %992 = vmatprep.subr.bf16.mxu0 0
      %993 = vmatpush1.bf16.msra.mxu0 %v974
      %994 = vmatprep.subr.bf16.mxu0 0
      %995 = vmatpush1.bf16.msra.mxu0 %v973
      %996 = vmatprep.subr.bf16.mxu0 0
      %997 = vmatpush1.bf16.msra.mxu0 %v972
      %998 = vmatprep.subr.bf16.mxu0 0
      %999 = vmatpush1.bf16.msra.mxu0 %v971
      %1000 = vmatprep.subr.bf16.mxu0 0
      %1001 = vmatpush1.bf16.msra.mxu0 %v970
      %1002 = vmatprep.subr.bf16.mxu0 0
      %1003 = vmatpush2.bf16.msra.mxu0 0
      %1004 = vmatprep.subr.bf16.mxu0 0
      %1005 = vmatpush2.bf16.msra.mxu0 0
      %1006 = vmatprep.subr.bf16.mxu0 0
      %1007 = vmatpush2.bf16.msra.mxu0 0
      %1008 = vmatprep.subr.bf16.mxu0 0
      %1009 = vmatpush2.bf16.msra.mxu0 0
      %1010 = vmatprep.subr.bf16.mxu0 0
      %1011 = vmatpush2.bf16.msra.mxu0 0
      %1012 = vmatprep.subr.bf16.mxu0 0
      %1013 = vmatpush2.bf16.msra.mxu0 0
      %1014 = vmatprep.subr.bf16.mxu0 0
      %1015 = vmatpush2.bf16.msra.mxu0 0
      %1016 = vmatprep.subr.bf16.mxu0 0
      %1017 = vmatpush2.bf16.msra.mxu0 0
      %1018 = vmatprep.mubr.bf16.mxu0 0
      %1019 = vmatmul.mubr.bf16.gmra.mxu0 %v918
      %v1020 = vpop.f32.mrf.mxu0
      %v1021 = vadd.f32 0.0, %v1020
      %v1022 = vpop.f32.mrf.mxu0
      %v1023 = vpop.f32.mrf.mxu0
      %v1024 = vadd.f32 0.0, %v1023
      %v1025 = vpop.f32.mrf.mxu0
      %1026 = vmatprep.mubr.bf16.mxu0 0
      %1027 = vmatmul.mubr.bf16.gmra.mxu0 %v919
      %v1028 = vpop.f32.mrf.mxu0
      %v1029 = vadd.f32 0.0, %v1028
      %v1030 = vpop.f32.mrf.mxu0
      %v1031 = vpop.f32.mrf.mxu0
      %v1032 = vadd.f32 0.0, %v1031
      %v1033 = vpop.f32.mrf.mxu0
      %1034 = vmatprep.mubr.bf16.mxu0 0
      %1035 = vmatmul.mubr.bf16.gmra.mxu0 %v920
      %v1036 = vpop.f32.mrf.mxu0
      %v1037 = vadd.f32 0.0, %v1036
      %v1038 = vpop.f32.mrf.mxu0
      %v1039 = vpop.f32.mrf.mxu0
      %v1040 = vadd.f32 0.0, %v1039
      %v1041 = vpop.f32.mrf.mxu0
      %1042 = vmatprep.mubr.bf16.mxu0 0
      %1043 = vmatmul.mubr.bf16.gmra.mxu0 %v921
      %v1044 = vpop.f32.mrf.mxu0
      %v1045 = vadd.f32 0.0, %v1044
      %v1046 = vpop.f32.mrf.mxu0
      %v1047 = vpop.f32.mrf.mxu0
      %v1048 = vadd.f32 0.0, %v1047
      %v1049 = vpop.f32.mrf.mxu0
      %1050 = vdwg.mxu0
      %v1051 = vadd.f32 %v872, %v1021
      %v1052 = vadd.f32 %v875, %v1024
      %v1053 = vadd.f32 %v880, %v1029
      %v1054 = vadd.f32 %v883, %v1032
      %v1055 = vadd.f32 %v888, %v1037
      %v1056 = vadd.f32 %v891, %v1040
      %v1057 = vadd.f32 %v896, %v1045
      %v1058 = vadd.f32 %v899, %v1048
      %v1059 = vld [vmem:[#allocation2 + $0xf] sm:$0xff]
      %v1060 = vld [vmem:[#allocation2 + $0x17] sm:$0xff]
      %v1061 = vld [vmem:[#allocation2 + $0x1f] sm:$0xff]
      %v1062 = vld [vmem:[#allocation2 + $0x27] sm:$0xff]
      %v1063 = vld [vmem:[#allocation2 + $0x2f] sm:$0xff]
      %v1064 = vld [vmem:[#allocation2 + $0x37] sm:$0xff]
      %v1065 = vld [vmem:[#allocation2 + $0x3f] sm:$0xff]
      %v1066 = vld [vmem:[#allocation2 + $0x47] sm:$0xff]
      %v1067 = vmul.f32 %v1059, %v572
      %v1068 = vmul.f32 %v1060, %v573
      %v1069 = vmul.f32 %v1061, %v574
      %v1070 = vmul.f32 %v1062, %v575
      %v1071 = vmul.f32 %v1063, %v576
      %v1072 = vmul.f32 %v1064, %v577
      %v1073 = vmul.f32 %v1065, %v578
      %v1074 = vmul.f32 %v1066, %v579
      %v1075 = vpack.c.bf16 %v1068, %v1067
      %v1076 = vpack.c.bf16 %v1070, %v1069
      %v1077 = vpack.c.bf16 %v1072, %v1071
      %v1078 = vpack.c.bf16 %v1074, %v1073
      %v1079 = vld [vmem:[%s3 + $0xc0] sm:$0xf]
      %v1080 = vld [vmem:[%s3 + $0xc4] sm:$0xf]
      %v1081 = vld [vmem:[%s3 + $0xc8] sm:$0xf]
      %v1082 = vld [vmem:[%s3 + $0xcc] sm:$0xf]
      %v1083 = vld [vmem:[%s3 + $0xd0] sm:$0xf]
      %v1084 = vld [vmem:[%s3 + $0xd4] sm:$0xf]
      %v1085 = vld [vmem:[%s3 + $0xd8] sm:$0xf]
      %v1086 = vld [vmem:[%s3 + $0xdc] sm:$0xf]
      %v1087 = vld [vmem:[%s3 + $0xe0] sm:$0xf]
      %v1088 = vld [vmem:[%s3 + $0xe4] sm:$0xf]
      %v1089 = vld [vmem:[%s3 + $0xe8] sm:$0xf]
      %v1090 = vld [vmem:[%s3 + $0xec] sm:$0xf]
      %v1091 = vld [vmem:[%s3 + $0xf0] sm:$0xf]
      %v1092 = vld [vmem:[%s3 + $0xf4] sm:$0xf]
      %v1093 = vld [vmem:[%s3 + $0xf8] sm:$0xf]
      %v1094 = vld [vmem:[%s3 + $0xfc] sm:$0xf]
      %v1111 = vunpack.c.l.b16 %v1079
      %v1112 = vunpack.c.l.b16 %v1080
      %v1113 = vunpack.c.l.b16 %v1081
      %v1114 = vunpack.c.l.b16 %v1082
      %v1115 = vunpack.c.l.b16 %v1083
      %v1116 = vunpack.c.l.b16 %v1084
      %v1117 = vunpack.c.l.b16 %v1085
      %v1118 = vunpack.c.l.b16 %v1086
      %v1119 = vunpack.c.l.b16 %v1087
      %v1120 = vunpack.c.l.b16 %v1088
      %v1121 = vunpack.c.l.b16 %v1089
      %v1122 = vunpack.c.l.b16 %v1090
      %v1123 = vunpack.c.l.b16 %v1091
      %v1124 = vunpack.c.l.b16 %v1092
      %v1125 = vunpack.c.l.b16 %v1093
      %v1126 = vunpack.c.l.b16 %v1094
      %v1127 = vpack.c.b16 %v1112, %v1111
      %v1128 = vpack.c.b16 %v1114, %v1113
      %v1129 = vpack.c.b16 %v1116, %v1115
      %v1130 = vpack.c.b16 %v1118, %v1117
      %v1131 = vpack.c.b16 %v1120, %v1119
      %v1132 = vpack.c.b16 %v1122, %v1121
      %v1133 = vpack.c.b16 %v1124, %v1123
      %v1134 = vpack.c.b16 %v1126, %v1125
      %1143 = vmatprep.subr.bf16.mxu0 0
      %1144 = vmatpush1.bf16.msra.mxu0 %v1134
      %1145 = vmatprep.subr.bf16.mxu0 0
      %1146 = vmatpush1.bf16.msra.mxu0 %v1133
      %1147 = vmatprep.subr.bf16.mxu0 0
      %1148 = vmatpush1.bf16.msra.mxu0 %v1132
      %1149 = vmatprep.subr.bf16.mxu0 0
      %1150 = vmatpush1.bf16.msra.mxu0 %v1131
      %1151 = vmatprep.subr.bf16.mxu0 0
      %1152 = vmatpush1.bf16.msra.mxu0 %v1130
      %1153 = vmatprep.subr.bf16.mxu0 0
      %1154 = vmatpush1.bf16.msra.mxu0 %v1129
      %1155 = vmatprep.subr.bf16.mxu0 0
      %1156 = vmatpush1.bf16.msra.mxu0 %v1128
      %1157 = vmatprep.subr.bf16.mxu0 0
      %1158 = vmatpush1.bf16.msra.mxu0 %v1127
      %1159 = vmatprep.subr.bf16.mxu0 0
      %1160 = vmatpush2.bf16.msra.mxu0 0
      %1161 = vmatprep.subr.bf16.mxu0 0
      %1162 = vmatpush2.bf16.msra.mxu0 0
      %1163 = vmatprep.subr.bf16.mxu0 0
      %1164 = vmatpush2.bf16.msra.mxu0 0
      %1165 = vmatprep.subr.bf16.mxu0 0
      %1166 = vmatpush2.bf16.msra.mxu0 0
      %1167 = vmatprep.subr.bf16.mxu0 0
      %1168 = vmatpush2.bf16.msra.mxu0 0
      %1169 = vmatprep.subr.bf16.mxu0 0
      %1170 = vmatpush2.bf16.msra.mxu0 0
      %1171 = vmatprep.subr.bf16.mxu0 0
      %1172 = vmatpush2.bf16.msra.mxu0 0
      %1173 = vmatprep.subr.bf16.mxu0 0
      %1174 = vmatpush2.bf16.msra.mxu0 0
      %1175 = vmatprep.mubr.bf16.mxu0 0
      %1176 = vmatmul.mubr.bf16.gmra.mxu0 %v1075
      %v1177 = vpop.f32.mrf.mxu0
      %v1178 = vadd.f32 0.0, %v1177
      %v1179 = vpop.f32.mrf.mxu0
      %v1180 = vpop.f32.mrf.mxu0
      %v1181 = vadd.f32 0.0, %v1180
      %v1182 = vpop.f32.mrf.mxu0
      %1183 = vmatprep.mubr.bf16.mxu0 0
      %1184 = vmatmul.mubr.bf16.gmra.mxu0 %v1076
      %v1185 = vpop.f32.mrf.mxu0
      %v1186 = vadd.f32 0.0, %v1185
      %v1187 = vpop.f32.mrf.mxu0
      %v1188 = vpop.f32.mrf.mxu0
      %v1189 = vadd.f32 0.0, %v1188
      %v1190 = vpop.f32.mrf.mxu0
      %1191 = vmatprep.mubr.bf16.mxu0 0
      %1192 = vmatmul.mubr.bf16.gmra.mxu0 %v1077
      %v1193 = vpop.f32.mrf.mxu0
      %v1194 = vadd.f32 0.0, %v1193
      %v1195 = vpop.f32.mrf.mxu0
      %v1196 = vpop.f32.mrf.mxu0
      %v1197 = vadd.f32 0.0, %v1196
      %v1198 = vpop.f32.mrf.mxu0
      %1199 = vmatprep.mubr.bf16.mxu0 0
      %1200 = vmatmul.mubr.bf16.gmra.mxu0 %v1078
      %v1201 = vpop.f32.mrf.mxu0
      %v1202 = vadd.f32 0.0, %v1201
      %v1203 = vpop.f32.mrf.mxu0
      %v1204 = vpop.f32.mrf.mxu0
      %v1205 = vadd.f32 0.0, %v1204
      %v1206 = vpop.f32.mrf.mxu0
      %1207 = vdwg.mxu0
      %v1208 = vadd.f32 %v1051, %v1178
      %v1209 = vadd.f32 %v1052, %v1181
      %v1210 = vadd.f32 %v1053, %v1186
      %v1211 = vadd.f32 %v1054, %v1189
      %v1212 = vadd.f32 %v1055, %v1194
      %v1213 = vadd.f32 %v1056, %v1197
      %v1214 = vadd.f32 %v1057, %v1202
      %v1215 = vadd.f32 %v1058, %v1205
      %v1216 = vld [vmem:[#allocation2 + $0x10] sm:$0xff]
      %v1217 = vld [vmem:[#allocation2 + $0x18] sm:$0xff]
      %v1218 = vld [vmem:[#allocation2 + $0x20] sm:$0xff]
      %v1219 = vld [vmem:[#allocation2 + $0x28] sm:$0xff]
      %v1220 = vld [vmem:[#allocation2 + $0x30] sm:$0xff]
      %v1221 = vld [vmem:[#allocation2 + $0x38] sm:$0xff]
      %v1222 = vld [vmem:[#allocation2 + $0x40] sm:$0xff]
      %v1223 = vld [vmem:[#allocation2 + $0x48] sm:$0xff]
      %v1224 = vpack.c.bf16 %v1217, %v1216
      %v1225 = vpack.c.bf16 %v1219, %v1218
      %v1226 = vpack.c.bf16 %v1221, %v1220
      %v1227 = vpack.c.bf16 %v1223, %v1222
      %v1228 = vld [vmem:[%s3 + $0x100] sm:$0xf]
      %v1229 = vld [vmem:[%s3 + $0x104] sm:$0xf]
      %v1230 = vld [vmem:[%s3 + $0x108] sm:$0xf]
      %v1231 = vld [vmem:[%s3 + $0x10c] sm:$0xf]
      %v1232 = vld [vmem:[%s3 + $0x110] sm:$0xf]
      %v1233 = vld [vmem:[%s3 + $0x114] sm:$0xf]
      %v1234 = vld [vmem:[%s3 + $0x118] sm:$0xf]
      %v1235 = vld [vmem:[%s3 + $0x11c] sm:$0xf]
      %v1236 = vld [vmem:[%s3 + $0x120] sm:$0xf]
      %v1237 = vld [vmem:[%s3 + $0x124] sm:$0xf]
      %v1238 = vld [vmem:[%s3 + $0x128] sm:$0xf]
      %v1239 = vld [vmem:[%s3 + $0x12c] sm:$0xf]
      %v1240 = vld [vmem:[%s3 + $0x130] sm:$0xf]
      %v1241 = vld [vmem:[%s3 + $0x134] sm:$0xf]
      %v1242 = vld [vmem:[%s3 + $0x138] sm:$0xf]
      %v1243 = vld [vmem:[%s3 + $0x13c] sm:$0xf]
      %v1260 = vunpack.c.l.b16 %v1228
      %v1261 = vunpack.c.l.b16 %v1229
      %v1262 = vunpack.c.l.b16 %v1230
      %v1263 = vunpack.c.l.b16 %v1231
      %v1264 = vunpack.c.l.b16 %v1232
      %v1265 = vunpack.c.l.b16 %v1233
      %v1266 = vunpack.c.l.b16 %v1234
      %v1267 = vunpack.c.l.b16 %v1235
      %v1268 = vunpack.c.l.b16 %v1236
      %v1269 = vunpack.c.l.b16 %v1237
      %v1270 = vunpack.c.l.b16 %v1238
      %v1271 = vunpack.c.l.b16 %v1239
      %v1272 = vunpack.c.l.b16 %v1240
      %v1273 = vunpack.c.l.b16 %v1241
      %v1274 = vunpack.c.l.b16 %v1242
      %v1275 = vunpack.c.l.b16 %v1243
      %v1276 = vpack.c.b16 %v1261, %v1260
      %v1277 = vpack.c.b16 %v1263, %v1262
      %v1278 = vpack.c.b16 %v1265, %v1264
      %v1279 = vpack.c.b16 %v1267, %v1266
      %v1280 = vpack.c.b16 %v1269, %v1268
      %v1281 = vpack.c.b16 %v1271, %v1270
      %v1282 = vpack.c.b16 %v1273, %v1272
      %v1283 = vpack.c.b16 %v1275, %v1274
      %1292 = vmatprep.subr.bf16.mxu0 0
      %1293 = vmatpush1.bf16.msra.mxu0 %v1283
      %1294 = vmatprep.subr.bf16.mxu0 0
      %1295 = vmatpush1.bf16.msra.mxu0 %v1282
      %1296 = vmatprep.subr.bf16.mxu0 0
      %1297 = vmatpush1.bf16.msra.mxu0 %v1281
      %1298 = vmatprep.subr.bf16.mxu0 0
      %1299 = vmatpush1.bf16.msra.mxu0 %v1280
      %1300 = vmatprep.subr.bf16.mxu0 0
      %1301 = vmatpush1.bf16.msra.mxu0 %v1279
      %1302 = vmatprep.subr.bf16.mxu0 0
      %1303 = vmatpush1.bf16.msra.mxu0 %v1278
      %1304 = vmatprep.subr.bf16.mxu0 0
      %1305 = vmatpush1.bf16.msra.mxu0 %v1277
      %1306 = vmatprep.subr.bf16.mxu0 0
      %1307 = vmatpush1.bf16.msra.mxu0 %v1276
      %1308 = vmatprep.subr.bf16.mxu0 0
      %1309 = vmatpush2.bf16.msra.mxu0 0
      %1310 = vmatprep.subr.bf16.mxu0 0
      %1311 = vmatpush2.bf16.msra.mxu0 0
      %1312 = vmatprep.subr.bf16.mxu0 0
      %1313 = vmatpush2.bf16.msra.mxu0 0
      %1314 = vmatprep.subr.bf16.mxu0 0
      %1315 = vmatpush2.bf16.msra.mxu0 0
      %1316 = vmatprep.subr.bf16.mxu0 0
      %1317 = vmatpush2.bf16.msra.mxu0 0
      %1318 = vmatprep.subr.bf16.mxu0 0
      %1319 = vmatpush2.bf16.msra.mxu0 0
      %1320 = vmatprep.subr.bf16.mxu0 0
      %1321 = vmatpush2.bf16.msra.mxu0 0
      %1322 = vmatprep.subr.bf16.mxu0 0
      %1323 = vmatpush2.bf16.msra.mxu0 0
      %1324 = vmatprep.mubr.bf16.mxu0 0
      %1325 = vmatmul.mubr.bf16.gmra.mxu0 %v1224
      %v1326 = vpop.f32.mrf.mxu0
      %v1327 = vadd.f32 0.0, %v1326
      %v1328 = vpop.f32.mrf.mxu0
      %v1329 = vpop.f32.mrf.mxu0
      %v1330 = vadd.f32 0.0, %v1329
      %v1331 = vpop.f32.mrf.mxu0
      %1332 = vmatprep.mubr.bf16.mxu0 0
      %1333 = vmatmul.mubr.bf16.gmra.mxu0 %v1225
      %v1334 = vpop.f32.mrf.mxu0
      %v1335 = vadd.f32 0.0, %v1334
      %v1336 = vpop.f32.mrf.mxu0
      %v1337 = vpop.f32.mrf.mxu0
      %v1338 = vadd.f32 0.0, %v1337
      %v1339 = vpop.f32.mrf.mxu0
      %1340 = vmatprep.mubr.bf16.mxu0 0
      %1341 = vmatmul.mubr.bf16.gmra.mxu0 %v1226
      %v1342 = vpop.f32.mrf.mxu0
      %v1343 = vadd.f32 0.0, %v1342
      %v1344 = vpop.f32.mrf.mxu0
      %v1345 = vpop.f32.mrf.mxu0
      %v1346 = vadd.f32 0.0, %v1345
      %v1347 = vpop.f32.mrf.mxu0
      %1348 = vmatprep.mubr.bf16.mxu0 0
      %1349 = vmatmul.mubr.bf16.gmra.mxu0 %v1227
      %v1350 = vpop.f32.mrf.mxu0
      %v1351 = vadd.f32 0.0, %v1350
      %v1352 = vpop.f32.mrf.mxu0
      %v1353 = vpop.f32.mrf.mxu0
      %v1354 = vadd.f32 0.0, %v1353
      %v1355 = vpop.f32.mrf.mxu0
      %1356 = vdwg.mxu0
      %v1357 = vadd.f32 %v1208, %v1327
      %v1358 = vadd.f32 %v1209, %v1330
      %v1359 = vadd.f32 %v1210, %v1335
      %v1360 = vadd.f32 %v1211, %v1338
      %v1361 = vadd.f32 %v1212, %v1343
      %v1362 = vadd.f32 %v1213, %v1346
      %v1363 = vadd.f32 %v1214, %v1351
      %v1364 = vadd.f32 %v1215, %v1354
      %v1365 = vld [vmem:[#allocation2 + $0x11] sm:$0xff]
      %v1366 = vld [vmem:[#allocation2 + $0x19] sm:$0xff]
      %v1367 = vld [vmem:[#allocation2 + $0x21] sm:$0xff]
      %v1368 = vld [vmem:[#allocation2 + $0x29] sm:$0xff]
      %v1369 = vld [vmem:[#allocation2 + $0x31] sm:$0xff]
      %v1370 = vld [vmem:[#allocation2 + $0x39] sm:$0xff]
      %v1371 = vld [vmem:[#allocation2 + $0x41] sm:$0xff]
      %v1372 = vld [vmem:[#allocation2 + $0x49] sm:$0xff]
      %v1373 = vmul.f32 %v1365, %v596
      %v1374 = vmul.f32 %v1366, %v597
      %v1375 = vmul.f32 %v1367, %v598
      %v1376 = vmul.f32 %v1368, %v599
      %v1377 = vmul.f32 %v1369, %v600
      %v1378 = vmul.f32 %v1370, %v601
      %v1379 = vmul.f32 %v1371, %v602
      %v1380 = vmul.f32 %v1372, %v603
      %v1381 = vpack.c.bf16 %v1374, %v1373
      %v1382 = vpack.c.bf16 %v1376, %v1375
      %v1383 = vpack.c.bf16 %v1378, %v1377
      %v1384 = vpack.c.bf16 %v1380, %v1379
      %v1385 = vld [vmem:[%s3 + $0x140] sm:$0xf]
      %v1386 = vld [vmem:[%s3 + $0x144] sm:$0xf]
      %v1387 = vld [vmem:[%s3 + $0x148] sm:$0xf]
      %v1388 = vld [vmem:[%s3 + $0x14c] sm:$0xf]
      %v1389 = vld [vmem:[%s3 + $0x150] sm:$0xf]
      %v1390 = vld [vmem:[%s3 + $0x154] sm:$0xf]
      %v1391 = vld [vmem:[%s3 + $0x158] sm:$0xf]
      %v1392 = vld [vmem:[%s3 + $0x15c] sm:$0xf]
      %v1393 = vld [vmem:[%s3 + $0x160] sm:$0xf]
      %v1394 = vld [vmem:[%s3 + $0x164] sm:$0xf]
      %v1395 = vld [vmem:[%s3 + $0x168] sm:$0xf]
      %v1396 = vld [vmem:[%s3 + $0x16c] sm:$0xf]
      %v1397 = vld [vmem:[%s3 + $0x170] sm:$0xf]
      %v1398 = vld [vmem:[%s3 + $0x174] sm:$0xf]
      %v1399 = vld [vmem:[%s3 + $0x178] sm:$0xf]
      %v1400 = vld [vmem:[%s3 + $0x17c] sm:$0xf]
      %v1417 = vunpack.c.l.b16 %v1385
      %v1418 = vunpack.c.l.b16 %v1386
      %v1419 = vunpack.c.l.b16 %v1387
      %v1420 = vunpack.c.l.b16 %v1388
      %v1421 = vunpack.c.l.b16 %v1389
      %v1422 = vunpack.c.l.b16 %v1390
      %v1423 = vunpack.c.l.b16 %v1391
      %v1424 = vunpack.c.l.b16 %v1392
      %v1425 = vunpack.c.l.b16 %v1393
      %v1426 = vunpack.c.l.b16 %v1394
      %v1427 = vunpack.c.l.b16 %v1395
      %v1428 = vunpack.c.l.b16 %v1396
      %v1429 = vunpack.c.l.b16 %v1397
      %v1430 = vunpack.c.l.b16 %v1398
      %v1431 = vunpack.c.l.b16 %v1399
      %v1432 = vunpack.c.l.b16 %v1400
      %v1433 = vpack.c.b16 %v1418, %v1417
      %v1434 = vpack.c.b16 %v1420, %v1419
      %v1435 = vpack.c.b16 %v1422, %v1421
      %v1436 = vpack.c.b16 %v1424, %v1423
      %v1437 = vpack.c.b16 %v1426, %v1425
      %v1438 = vpack.c.b16 %v1428, %v1427
      %v1439 = vpack.c.b16 %v1430, %v1429
      %v1440 = vpack.c.b16 %v1432, %v1431
      %1449 = vmatprep.subr.bf16.mxu0 0
      %1450 = vmatpush1.bf16.msra.mxu0 %v1440
      %1451 = vmatprep.subr.bf16.mxu0 0
      %1452 = vmatpush1.bf16.msra.mxu0 %v1439
      %1453 = vmatprep.subr.bf16.mxu0 0
      %1454 = vmatpush1.bf16.msra.mxu0 %v1438
      %1455 = vmatprep.subr.bf16.mxu0 0
      %1456 = vmatpush1.bf16.msra.mxu0 %v1437
      %1457 = vmatprep.subr.bf16.mxu0 0
      %1458 = vmatpush1.bf16.msra.mxu0 %v1436
      %1459 = vmatprep.subr.bf16.mxu0 0
      %1460 = vmatpush1.bf16.msra.mxu0 %v1435
      %1461 = vmatprep.subr.bf16.mxu0 0
      %1462 = vmatpush1.bf16.msra.mxu0 %v1434
      %1463 = vmatprep.subr.bf16.mxu0 0
      %1464 = vmatpush1.bf16.msra.mxu0 %v1433
      %1465 = vmatprep.subr.bf16.mxu0 0
      %1466 = vmatpush2.bf16.msra.mxu0 0
      %1467 = vmatprep.subr.bf16.mxu0 0
      %1468 = vmatpush2.bf16.msra.mxu0 0
      %1469 = vmatprep.subr.bf16.mxu0 0
      %1470 = vmatpush2.bf16.msra.mxu0 0
      %1471 = vmatprep.subr.bf16.mxu0 0
      %1472 = vmatpush2.bf16.msra.mxu0 0
      %1473 = vmatprep.subr.bf16.mxu0 0
      %1474 = vmatpush2.bf16.msra.mxu0 0
      %1475 = vmatprep.subr.bf16.mxu0 0
      %1476 = vmatpush2.bf16.msra.mxu0 0
      %1477 = vmatprep.subr.bf16.mxu0 0
      %1478 = vmatpush2.bf16.msra.mxu0 0
      %1479 = vmatprep.subr.bf16.mxu0 0
      %1480 = vmatpush2.bf16.msra.mxu0 0
      %1481 = vmatprep.mubr.bf16.mxu0 0
      %1482 = vmatmul.mubr.bf16.gmra.mxu0 %v1381
      %v1483 = vpop.f32.mrf.mxu0
      %v1484 = vadd.f32 0.0, %v1483
      %v1485 = vpop.f32.mrf.mxu0
      %v1486 = vpop.f32.mrf.mxu0
      %v1487 = vadd.f32 0.0, %v1486
      %v1488 = vpop.f32.mrf.mxu0
      %1489 = vmatprep.mubr.bf16.mxu0 0
      %1490 = vmatmul.mubr.bf16.gmra.mxu0 %v1382
      %v1491 = vpop.f32.mrf.mxu0
      %v1492 = vadd.f32 0.0, %v1491
      %v1493 = vpop.f32.mrf.mxu0
      %v1494 = vpop.f32.mrf.mxu0
      %v1495 = vadd.f32 0.0, %v1494
      %v1496 = vpop.f32.mrf.mxu0
      %1497 = vmatprep.mubr.bf16.mxu0 0
      %1498 = vmatmul.mubr.bf16.gmra.mxu0 %v1383
      %v1499 = vpop.f32.mrf.mxu0
      %v1500 = vadd.f32 0.0, %v1499
      %v1501 = vpop.f32.mrf.mxu0
      %v1502 = vpop.f32.mrf.mxu0
      %v1503 = vadd.f32 0.0, %v1502
      %v1504 = vpop.f32.mrf.mxu0
      %1505 = vmatprep.mubr.bf16.mxu0 0
      %1506 = vmatmul.mubr.bf16.gmra.mxu0 %v1384
      %v1507 = vpop.f32.mrf.mxu0
      %v1508 = vadd.f32 0.0, %v1507
      %v1509 = vpop.f32.mrf.mxu0
      %v1510 = vpop.f32.mrf.mxu0
      %v1511 = vadd.f32 0.0, %v1510
      %v1512 = vpop.f32.mrf.mxu0
      %1513 = vdwg.mxu0
      %v1514 = vadd.f32 %v1357, %v1484
      %v1515 = vadd.f32 %v1358, %v1487
      %v1516 = vadd.f32 %v1359, %v1492
      %v1517 = vadd.f32 %v1360, %v1495
      %v1518 = vadd.f32 %v1361, %v1500
      %v1519 = vadd.f32 %v1362, %v1503
      %v1520 = vadd.f32 %v1363, %v1508
      %v1521 = vadd.f32 %v1364, %v1511
      %v1522 = vld [vmem:[#allocation2 + $0x17] sm:$0xff]
      %v1523 = vld [vmem:[#allocation2 + $0x1f] sm:$0xff]
      %v1524 = vld [vmem:[#allocation2 + $0x27] sm:$0xff]
      %v1525 = vld [vmem:[#allocation2 + $0x2f] sm:$0xff]
      %v1526 = vld [vmem:[#allocation2 + $0x37] sm:$0xff]
      %v1527 = vld [vmem:[#allocation2 + $0x3f] sm:$0xff]
      %v1528 = vld [vmem:[#allocation2 + $0x47] sm:$0xff]
      %v1529 = vld [vmem:[#allocation2 + $0x4f] sm:$0xff]
      %v1530 = vmul.f32 %v1522, %v572
      %v1531 = vmul.f32 %v1523, %v573
      %v1532 = vmul.f32 %v1524, %v574
      %v1533 = vmul.f32 %v1525, %v575
      %v1534 = vmul.f32 %v1526, %v576
      %v1535 = vmul.f32 %v1527, %v577
      %v1536 = vmul.f32 %v1528, %v578
      %v1537 = vmul.f32 %v1529, %v579
      %v1538 = vpack.c.bf16 %v1531, %v1530
      %v1539 = vpack.c.bf16 %v1533, %v1532
      %v1540 = vpack.c.bf16 %v1535, %v1534
      %v1541 = vpack.c.bf16 %v1537, %v1536
      %v1542 = vld [vmem:[%s3 + $0x180] sm:$0xf]
      %v1543 = vld [vmem:[%s3 + $0x184] sm:$0xf]
      %v1544 = vld [vmem:[%s3 + $0x188] sm:$0xf]
      %v1545 = vld [vmem:[%s3 + $0x18c] sm:$0xf]
      %v1546 = vld [vmem:[%s3 + $0x190] sm:$0xf]
      %v1547 = vld [vmem:[%s3 + $0x194] sm:$0xf]
      %v1548 = vld [vmem:[%s3 + $0x198] sm:$0xf]
      %v1549 = vld [vmem:[%s3 + $0x19c] sm:$0xf]
      %v1550 = vld [vmem:[%s3 + $0x1a0] sm:$0xf]
      %v1551 = vld [vmem:[%s3 + $0x1a4] sm:$0xf]
      %v1552 = vld [vmem:[%s3 + $0x1a8] sm:$0xf]
      %v1553 = vld [vmem:[%s3 + $0x1ac] sm:$0xf]
      %v1554 = vld [vmem:[%s3 + $0x1b0] sm:$0xf]
      %v1555 = vld [vmem:[%s3 + $0x1b4] sm:$0xf]
      %v1556 = vld [vmem:[%s3 + $0x1b8] sm:$0xf]
      %v1557 = vld [vmem:[%s3 + $0x1bc] sm:$0xf]
      %v1574 = vunpack.c.l.b16 %v1542
      %v1575 = vunpack.c.l.b16 %v1543
      %v1576 = vunpack.c.l.b16 %v1544
      %v1577 = vunpack.c.l.b16 %v1545
      %v1578 = vunpack.c.l.b16 %v1546
      %v1579 = vunpack.c.l.b16 %v1547
      %v1580 = vunpack.c.l.b16 %v1548
      %v1581 = vunpack.c.l.b16 %v1549
      %v1582 = vunpack.c.l.b16 %v1550
      %v1583 = vunpack.c.l.b16 %v1551
      %v1584 = vunpack.c.l.b16 %v1552
      %v1585 = vunpack.c.l.b16 %v1553
      %v1586 = vunpack.c.l.b16 %v1554
      %v1587 = vunpack.c.l.b16 %v1555
      %v1588 = vunpack.c.l.b16 %v1556
      %v1589 = vunpack.c.l.b16 %v1557
      %v1590 = vpack.c.b16 %v1575, %v1574
      %v1591 = vpack.c.b16 %v1577, %v1576
      %v1592 = vpack.c.b16 %v1579, %v1578
      %v1593 = vpack.c.b16 %v1581, %v1580
      %v1594 = vpack.c.b16 %v1583, %v1582
      %v1595 = vpack.c.b16 %v1585, %v1584
      %v1596 = vpack.c.b16 %v1587, %v1586
      %v1597 = vpack.c.b16 %v1589, %v1588
      %1606 = vmatprep.subr.bf16.mxu0 0
      %1607 = vmatpush1.bf16.msra.mxu0 %v1597
      %1608 = vmatprep.subr.bf16.mxu0 0
      %1609 = vmatpush1.bf16.msra.mxu0 %v1596
      %1610 = vmatprep.subr.bf16.mxu0 0
      %1611 = vmatpush1.bf16.msra.mxu0 %v1595
      %1612 = vmatprep.subr.bf16.mxu0 0
      %1613 = vmatpush1.bf16.msra.mxu0 %v1594
      %1614 = vmatprep.subr.bf16.mxu0 0
      %1615 = vmatpush1.bf16.msra.mxu0 %v1593
      %1616 = vmatprep.subr.bf16.mxu0 0
      %1617 = vmatpush1.bf16.msra.mxu0 %v1592
      %1618 = vmatprep.subr.bf16.mxu0 0
      %1619 = vmatpush1.bf16.msra.mxu0 %v1591
      %1620 = vmatprep.subr.bf16.mxu0 0
      %1621 = vmatpush1.bf16.msra.mxu0 %v1590
      %1622 = vmatprep.subr.bf16.mxu0 0
      %1623 = vmatpush2.bf16.msra.mxu0 0
      %1624 = vmatprep.subr.bf16.mxu0 0
      %1625 = vmatpush2.bf16.msra.mxu0 0
      %1626 = vmatprep.subr.bf16.mxu0 0
      %1627 = vmatpush2.bf16.msra.mxu0 0
      %1628 = vmatprep.subr.bf16.mxu0 0
      %1629 = vmatpush2.bf16.msra.mxu0 0
      %1630 = vmatprep.subr.bf16.mxu0 0
      %1631 = vmatpush2.bf16.msra.mxu0 0
      %1632 = vmatprep.subr.bf16.mxu0 0
      %1633 = vmatpush2.bf16.msra.mxu0 0
      %1634 = vmatprep.subr.bf16.mxu0 0
      %1635 = vmatpush2.bf16.msra.mxu0 0
      %1636 = vmatprep.subr.bf16.mxu0 0
      %1637 = vmatpush2.bf16.msra.mxu0 0
      %1638 = vmatprep.mubr.bf16.mxu0 0
      %1639 = vmatmul.mubr.bf16.gmra.mxu0 %v1538
      %v1640 = vpop.f32.mrf.mxu0
      %v1641 = vadd.f32 0.0, %v1640
      %v1642 = vpop.f32.mrf.mxu0
      %v1643 = vpop.f32.mrf.mxu0
      %v1644 = vadd.f32 0.0, %v1643
      %v1645 = vpop.f32.mrf.mxu0
      %1646 = vmatprep.mubr.bf16.mxu0 0
      %1647 = vmatmul.mubr.bf16.gmra.mxu0 %v1539
      %v1648 = vpop.f32.mrf.mxu0
      %v1649 = vadd.f32 0.0, %v1648
      %v1650 = vpop.f32.mrf.mxu0
      %v1651 = vpop.f32.mrf.mxu0
      %v1652 = vadd.f32 0.0, %v1651
      %v1653 = vpop.f32.mrf.mxu0
      %1654 = vmatprep.mubr.bf16.mxu0 0
      %1655 = vmatmul.mubr.bf16.gmra.mxu0 %v1540
      %v1656 = vpop.f32.mrf.mxu0
      %v1657 = vadd.f32 0.0, %v1656
      %v1658 = vpop.f32.mrf.mxu0
      %v1659 = vpop.f32.mrf.mxu0
      %v1660 = vadd.f32 0.0, %v1659
      %v1661 = vpop.f32.mrf.mxu0
      %1662 = vmatprep.mubr.bf16.mxu0 0
      %1663 = vmatmul.mubr.bf16.gmra.mxu0 %v1541
      %v1664 = vpop.f32.mrf.mxu0
      %v1665 = vadd.f32 0.0, %v1664
      %v1666 = vpop.f32.mrf.mxu0
      %v1667 = vpop.f32.mrf.mxu0
      %v1668 = vadd.f32 0.0, %v1667
      %v1669 = vpop.f32.mrf.mxu0
      %1670 = vdwg.mxu0
      %v1671 = vadd.f32 %v1514, %v1641
      %v1672 = vadd.f32 %v1515, %v1644
      %v1673 = vadd.f32 %v1516, %v1649
      %v1674 = vadd.f32 %v1517, %v1652
      %v1675 = vadd.f32 %v1518, %v1657
      %v1676 = vadd.f32 %v1519, %v1660
      %v1677 = vadd.f32 %v1520, %v1665
      %v1678 = vadd.f32 %v1521, %v1668
      %v1679 = vld [vmem:[#allocation2 + $0x18] sm:$0xff]
      %v1680 = vld [vmem:[#allocation2 + $0x20] sm:$0xff]
      %v1681 = vld [vmem:[#allocation2 + $0x28] sm:$0xff]
      %v1682 = vld [vmem:[#allocation2 + $0x30] sm:$0xff]
      %v1683 = vld [vmem:[#allocation2 + $0x38] sm:$0xff]
      %v1684 = vld [vmem:[#allocation2 + $0x40] sm:$0xff]
      %v1685 = vld [vmem:[#allocation2 + $0x48] sm:$0xff]
      %v1686 = vld [vmem:[#allocation2 + $0x50] sm:$0xff]
      %v1687 = vpack.c.bf16 %v1680, %v1679
      %v1688 = vpack.c.bf16 %v1682, %v1681
      %v1689 = vpack.c.bf16 %v1684, %v1683
      %v1690 = vpack.c.bf16 %v1686, %v1685
      %v1691 = vld [vmem:[%s3 + $0x1c0] sm:$0xf]
      %v1692 = vld [vmem:[%s3 + $0x1c4] sm:$0xf]
      %v1693 = vld [vmem:[%s3 + $0x1c8] sm:$0xf]
      %v1694 = vld [vmem:[%s3 + $0x1cc] sm:$0xf]
      %v1695 = vld [vmem:[%s3 + $0x1d0] sm:$0xf]
      %v1696 = vld [vmem:[%s3 + $0x1d4] sm:$0xf]
      %v1697 = vld [vmem:[%s3 + $0x1d8] sm:$0xf]
      %v1698 = vld [vmem:[%s3 + $0x1dc] sm:$0xf]
      %v1699 = vld [vmem:[%s3 + $0x1e0] sm:$0xf]
      %v1700 = vld [vmem:[%s3 + $0x1e4] sm:$0xf]
      %v1701 = vld [vmem:[%s3 + $0x1e8] sm:$0xf]
      %v1702 = vld [vmem:[%s3 + $0x1ec] sm:$0xf]
      %v1703 = vld [vmem:[%s3 + $0x1f0] sm:$0xf]
      %v1704 = vld [vmem:[%s3 + $0x1f4] sm:$0xf]
      %v1705 = vld [vmem:[%s3 + $0x1f8] sm:$0xf]
      %v1706 = vld [vmem:[%s3 + $0x1fc] sm:$0xf]
      %v1723 = vunpack.c.l.b16 %v1691
      %v1724 = vunpack.c.l.b16 %v1692
      %v1725 = vunpack.c.l.b16 %v1693
      %v1726 = vunpack.c.l.b16 %v1694
      %v1727 = vunpack.c.l.b16 %v1695
      %v1728 = vunpack.c.l.b16 %v1696
      %v1729 = vunpack.c.l.b16 %v1697
      %v1730 = vunpack.c.l.b16 %v1698
      %v1731 = vunpack.c.l.b16 %v1699
      %v1732 = vunpack.c.l.b16 %v1700
      %v1733 = vunpack.c.l.b16 %v1701
      %v1734 = vunpack.c.l.b16 %v1702
      %v1735 = vunpack.c.l.b16 %v1703
      %v1736 = vunpack.c.l.b16 %v1704
      %v1737 = vunpack.c.l.b16 %v1705
      %v1738 = vunpack.c.l.b16 %v1706
      %v1739 = vpack.c.b16 %v1724, %v1723
      %v1740 = vpack.c.b16 %v1726, %v1725
      %v1741 = vpack.c.b16 %v1728, %v1727
      %v1742 = vpack.c.b16 %v1730, %v1729
      %v1743 = vpack.c.b16 %v1732, %v1731
      %v1744 = vpack.c.b16 %v1734, %v1733
      %v1745 = vpack.c.b16 %v1736, %v1735
      %v1746 = vpack.c.b16 %v1738, %v1737
      %1755 = vmatprep.subr.bf16.mxu0 0
      %1756 = vmatpush1.bf16.msra.mxu0 %v1746
      %1757 = vmatprep.subr.bf16.mxu0 0
      %1758 = vmatpush1.bf16.msra.mxu0 %v1745
      %1759 = vmatprep.subr.bf16.mxu0 0
      %1760 = vmatpush1.bf16.msra.mxu0 %v1744
      %1761 = vmatprep.subr.bf16.mxu0 0
      %1762 = vmatpush1.bf16.msra.mxu0 %v1743
      %1763 = vmatprep.subr.bf16.mxu0 0
      %1764 = vmatpush1.bf16.msra.mxu0 %v1742
      %1765 = vmatprep.subr.bf16.mxu0 0
      %1766 = vmatpush1.bf16.msra.mxu0 %v1741
      %1767 = vmatprep.subr.bf16.mxu0 0
      %1768 = vmatpush1.bf16.msra.mxu0 %v1740
      %1769 = vmatprep.subr.bf16.mxu0 0
      %1770 = vmatpush1.bf16.msra.mxu0 %v1739
      %1771 = vmatprep.subr.bf16.mxu0 0
      %1772 = vmatpush2.bf16.msra.mxu0 0
      %1773 = vmatprep.subr.bf16.mxu0 0
      %1774 = vmatpush2.bf16.msra.mxu0 0
      %1775 = vmatprep.subr.bf16.mxu0 0
      %1776 = vmatpush2.bf16.msra.mxu0 0
      %1777 = vmatprep.subr.bf16.mxu0 0
      %1778 = vmatpush2.bf16.msra.mxu0 0
      %1779 = vmatprep.subr.bf16.mxu0 0
      %1780 = vmatpush2.bf16.msra.mxu0 0
      %1781 = vmatprep.subr.bf16.mxu0 0
      %1782 = vmatpush2.bf16.msra.mxu0 0
      %1783 = vmatprep.subr.bf16.mxu0 0
      %1784 = vmatpush2.bf16.msra.mxu0 0
      %1785 = vmatprep.subr.bf16.mxu0 0
      %1786 = vmatpush2.bf16.msra.mxu0 0
      %1787 = vmatprep.mubr.bf16.mxu0 0
      %1788 = vmatmul.mubr.bf16.gmra.mxu0 %v1687
      %v1789 = vpop.f32.mrf.mxu0
      %v1790 = vadd.f32 0.0, %v1789
      %v1791 = vpop.f32.mrf.mxu0
      %v1792 = vpop.f32.mrf.mxu0
      %v1793 = vadd.f32 0.0, %v1792
      %v1794 = vpop.f32.mrf.mxu0
      %1795 = vmatprep.mubr.bf16.mxu0 0
      %1796 = vmatmul.mubr.bf16.gmra.mxu0 %v1688
      %v1797 = vpop.f32.mrf.mxu0
      %v1798 = vadd.f32 0.0, %v1797
      %v1799 = vpop.f32.mrf.mxu0
      %v1800 = vpop.f32.mrf.mxu0
      %v1801 = vadd.f32 0.0, %v1800
      %v1802 = vpop.f32.mrf.mxu0
      %1803 = vmatprep.mubr.bf16.mxu0 0
      %1804 = vmatmul.mubr.bf16.gmra.mxu0 %v1689
      %v1805 = vpop.f32.mrf.mxu0
      %v1806 = vadd.f32 0.0, %v1805
      %v1807 = vpop.f32.mrf.mxu0
      %v1808 = vpop.f32.mrf.mxu0
      %v1809 = vadd.f32 0.0, %v1808
      %v1810 = vpop.f32.mrf.mxu0
      %1811 = vmatprep.mubr.bf16.mxu0 0
      %1812 = vmatmul.mubr.bf16.gmra.mxu0 %v1690
      %v1813 = vpop.f32.mrf.mxu0
      %v1814 = vadd.f32 0.0, %v1813
      %v1815 = vpop.f32.mrf.mxu0
      %v1816 = vpop.f32.mrf.mxu0
      %v1817 = vadd.f32 0.0, %v1816
      %v1818 = vpop.f32.mrf.mxu0
      %1819 = vdwg.mxu0
      %v1820 = vadd.f32 %v1671, %v1790
      %v1821 = vadd.f32 %v1672, %v1793
      %v1822 = vadd.f32 %v1673, %v1798
      %v1823 = vadd.f32 %v1674, %v1801
      %v1824 = vadd.f32 %v1675, %v1806
      %v1825 = vadd.f32 %v1676, %v1809
      %v1826 = vadd.f32 %v1677, %v1814
      %v1827 = vadd.f32 %v1678, %v1817
      %v1828 = vld [vmem:[#allocation2 + $0x19] sm:$0xff]
      %v1829 = vld [vmem:[#allocation2 + $0x21] sm:$0xff]
      %v1830 = vld [vmem:[#allocation2 + $0x29] sm:$0xff]
      %v1831 = vld [vmem:[#allocation2 + $0x31] sm:$0xff]
      %v1832 = vld [vmem:[#allocation2 + $0x39] sm:$0xff]
      %v1833 = vld [vmem:[#allocation2 + $0x41] sm:$0xff]
      %v1834 = vld [vmem:[#allocation2 + $0x49] sm:$0xff]
      %v1835 = vld [vmem:[#allocation2 + $0x51] sm:$0xff]
      %v1836 = vmul.f32 %v1828, %v596
      %v1837 = vmul.f32 %v1829, %v597
      %v1838 = vmul.f32 %v1830, %v598
      %v1839 = vmul.f32 %v1831, %v599
      %v1840 = vmul.f32 %v1832, %v600
      %v1841 = vmul.f32 %v1833, %v601
      %v1842 = vmul.f32 %v1834, %v602
      %v1843 = vmul.f32 %v1835, %v603
      %v1844 = vpack.c.bf16 %v1837, %v1836
      %v1845 = vpack.c.bf16 %v1839, %v1838
      %v1846 = vpack.c.bf16 %v1841, %v1840
      %v1847 = vpack.c.bf16 %v1843, %v1842
      %v1848 = vld [vmem:[%s3 + $0x200] sm:$0xf]
      %v1849 = vld [vmem:[%s3 + $0x204] sm:$0xf]
      %v1850 = vld [vmem:[%s3 + $0x208] sm:$0xf]
      %v1851 = vld [vmem:[%s3 + $0x20c] sm:$0xf]
      %v1852 = vld [vmem:[%s3 + $0x210] sm:$0xf]
      %v1853 = vld [vmem:[%s3 + $0x214] sm:$0xf]
      %v1854 = vld [vmem:[%s3 + $0x218] sm:$0xf]
      %v1855 = vld [vmem:[%s3 + $0x21c] sm:$0xf]
      %v1856 = vld [vmem:[%s3 + $0x220] sm:$0xf]
      %v1857 = vld [vmem:[%s3 + $0x224] sm:$0xf]
      %v1858 = vld [vmem:[%s3 + $0x228] sm:$0xf]
      %v1859 = vld [vmem:[%s3 + $0x22c] sm:$0xf]
      %v1860 = vld [vmem:[%s3 + $0x230] sm:$0xf]
      %v1861 = vld [vmem:[%s3 + $0x234] sm:$0xf]
      %v1862 = vld [vmem:[%s3 + $0x238] sm:$0xf]
      %v1863 = vld [vmem:[%s3 + $0x23c] sm:$0xf]
      %v1880 = vunpack.c.l.b16 %v1848
      %v1881 = vunpack.c.l.b16 %v1849
      %v1882 = vunpack.c.l.b16 %v1850
      %v1883 = vunpack.c.l.b16 %v1851
      %v1884 = vunpack.c.l.b16 %v1852
      %v1885 = vunpack.c.l.b16 %v1853
      %v1886 = vunpack.c.l.b16 %v1854
      %v1887 = vunpack.c.l.b16 %v1855
      %v1888 = vunpack.c.l.b16 %v1856
      %v1889 = vunpack.c.l.b16 %v1857
      %v1890 = vunpack.c.l.b16 %v1858
      %v1891 = vunpack.c.l.b16 %v1859
      %v1892 = vunpack.c.l.b16 %v1860
      %v1893 = vunpack.c.l.b16 %v1861
      %v1894 = vunpack.c.l.b16 %v1862
      %v1895 = vunpack.c.l.b16 %v1863
      %v1896 = vpack.c.b16 %v1881, %v1880
      %v1897 = vpack.c.b16 %v1883, %v1882
      %v1898 = vpack.c.b16 %v1885, %v1884
      %v1899 = vpack.c.b16 %v1887, %v1886
      %v1900 = vpack.c.b16 %v1889, %v1888
      %v1901 = vpack.c.b16 %v1891, %v1890
      %v1902 = vpack.c.b16 %v1893, %v1892
      %v1903 = vpack.c.b16 %v1895, %v1894
      %1912 = vmatprep.subr.bf16.mxu0 0
      %1913 = vmatpush1.bf16.msra.mxu0 %v1903
      %1914 = vmatprep.subr.bf16.mxu0 0
      %1915 = vmatpush1.bf16.msra.mxu0 %v1902
      %1916 = vmatprep.subr.bf16.mxu0 0
      %1917 = vmatpush1.bf16.msra.mxu0 %v1901
      %1918 = vmatprep.subr.bf16.mxu0 0
      %1919 = vmatpush1.bf16.msra.mxu0 %v1900
      %1920 = vmatprep.subr.bf16.mxu0 0
      %1921 = vmatpush1.bf16.msra.mxu0 %v1899
      %1922 = vmatprep.subr.bf16.mxu0 0
      %1923 = vmatpush1.bf16.msra.mxu0 %v1898
      %1924 = vmatprep.subr.bf16.mxu0 0
      %1925 = vmatpush1.bf16.msra.mxu0 %v1897
      %1926 = vmatprep.subr.bf16.mxu0 0
      %1927 = vmatpush1.bf16.msra.mxu0 %v1896
      %1928 = vmatprep.subr.bf16.mxu0 0
      %1929 = vmatpush2.bf16.msra.mxu0 0
      %1930 = vmatprep.subr.bf16.mxu0 0
      %1931 = vmatpush2.bf16.msra.mxu0 0
      %1932 = vmatprep.subr.bf16.mxu0 0
      %1933 = vmatpush2.bf16.msra.mxu0 0
      %1934 = vmatprep.subr.bf16.mxu0 0
      %1935 = vmatpush2.bf16.msra.mxu0 0
      %1936 = vmatprep.subr.bf16.mxu0 0
      %1937 = vmatpush2.bf16.msra.mxu0 0
      %1938 = vmatprep.subr.bf16.mxu0 0
      %1939 = vmatpush2.bf16.msra.mxu0 0
      %1940 = vmatprep.subr.bf16.mxu0 0
      %1941 = vmatpush2.bf16.msra.mxu0 0
      %1942 = vmatprep.subr.bf16.mxu0 0
      %1943 = vmatpush2.bf16.msra.mxu0 0
      %1944 = vmatprep.mubr.bf16.mxu0 0
      %1945 = vmatmul.mubr.bf16.gmra.mxu0 %v1844
      %v1946 = vpop.f32.mrf.mxu0
      %v1947 = vadd.f32 0.0, %v1946
      %v1948 = vpop.f32.mrf.mxu0
      %v1949 = vpop.f32.mrf.mxu0
      %v1950 = vadd.f32 0.0, %v1949
      %v1951 = vpop.f32.mrf.mxu0
      %1952 = vmatprep.mubr.bf16.mxu0 0
      %1953 = vmatmul.mubr.bf16.gmra.mxu0 %v1845
      %v1954 = vpop.f32.mrf.mxu0
      %v1955 = vadd.f32 0.0, %v1954
      %v1956 = vpop.f32.mrf.mxu0
      %v1957 = vpop.f32.mrf.mxu0
      %v1958 = vadd.f32 0.0, %v1957
      %v1959 = vpop.f32.mrf.mxu0
      %1960 = vmatprep.mubr.bf16.mxu0 0
      %1961 = vmatmul.mubr.bf16.gmra.mxu0 %v1846
      %v1962 = vpop.f32.mrf.mxu0
      %v1963 = vadd.f32 0.0, %v1962
      %v1964 = vpop.f32.mrf.mxu0
      %v1965 = vpop.f32.mrf.mxu0
      %v1966 = vadd.f32 0.0, %v1965
      %v1967 = vpop.f32.mrf.mxu0
      %1968 = vmatprep.mubr.bf16.mxu0 0
      %1969 = vmatmul.mubr.bf16.gmra.mxu0 %v1847
      %v1970 = vpop.f32.mrf.mxu0
      %v1971 = vadd.f32 0.0, %v1970
      %v1972 = vpop.f32.mrf.mxu0
      %v1973 = vpop.f32.mrf.mxu0
      %v1974 = vadd.f32 0.0, %v1973
      %v1975 = vpop.f32.mrf.mxu0
      %1976 = vdwg.mxu0
      %v1977 = vadd.f32 %v1820, %v1947
      %v1978 = vadd.f32 %v1821, %v1950
      %v1979 = vadd.f32 %v1822, %v1955
      %v1980 = vadd.f32 %v1823, %v1958
      %v1981 = vadd.f32 %v1824, %v1963
      %v1982 = vadd.f32 %v1825, %v1966
      %v1983 = vadd.f32 %v1826, %v1971
      %v1984 = vadd.f32 %v1827, %v1974
      %v1985 = vld [vmem:[%s4] sm:$0x1]
      %v1987 = vlaneseq
      %v1988 = vshrl.u32 %v1987, 7
      %v1989 = vsub.s32 0, %v1988
      %v1990 = vrot.slane %v1985, %v1989
      %v1992 = vadd.f32 %v1977, %v1990
      %v1993 = vadd.f32 %v1978, %v1990
      %v1994 = vadd.f32 %v1979, %v1990
      %v1995 = vadd.f32 %v1980, %v1990
      %v1996 = vadd.f32 %v1981, %v1990
      %v1997 = vadd.f32 %v1982, %v1990
      %v1998 = vadd.f32 %v1983, %v1990
      %v1999 = vadd.f32 %v1984, %v1990
      %v2000 = vadd.f32 %v1992, %v407
      %v2001 = vadd.f32 %v1993, %v411
      %v2002 = vadd.f32 %v1994, %v417
      %v2003 = vadd.f32 %v1995, %v421
      %v2004 = vadd.f32 %v1996, %v427
      %v2005 = vadd.f32 %v1997, %v431
      %v2006 = vadd.f32 %v1998, %v437
      %v2007 = vadd.f32 %v1999, %v441
      %v2008 = vmax.f32 %v2000, 0.0
      %v2009 = vmax.f32 %v2001, 0.0
      %v2010 = vmax.f32 %v2002, 0.0
      %v2011 = vmax.f32 %v2003, 0.0
      %v2012 = vmax.f32 %v2004, 0.0
      %v2013 = vmax.f32 %v2005, 0.0
      %v2014 = vmax.f32 %v2006, 0.0
      %v2015 = vmax.f32 %v2007, 0.0
      %2016 = vst [vmem:[%s224] sm:$0xff] %v2008
      %2017 = vst [vmem:[%s224 + $0x8] sm:$0xff] %v2009
      %2018 = vst [vmem:[%s224 + $0x10] sm:$0xff] %v2010
      %2019 = vst [vmem:[%s224 + $0x18] sm:$0xff] %v2011
      %2020 = vst [vmem:[%s224 + $0x20] sm:$0xff] %v2012
      %2021 = vst [vmem:[%s224 + $0x28] sm:$0xff] %v2013
      %2022 = vst [vmem:[%s224 + $0x30] sm:$0xff] %v2014
      %2023 = vst [vmem:[%s224 + $0x38] sm:$0xff] %v2015
      %p2024 = scmp.lt.s32.totalorder %s16, 1
      %s2025 = scalar_select %p2024, %s16, 1
      %s2026 = smul.addr %s2025, 8
      %s2027 = smul.addr %s2026, 8
      %s2028 = scalar_lea.vmem %s5, %s2027
      // Predicated region
      $region41: #{residual_block_forward.1} parent=39 // pred_check
        %p2029 = pneg %p144
      $region42: #{residual_block_forward.1} parent=39 // pred_check_branch
        %2031 = sbr.rel (%p2029) target = $region44
      $region43: #{residual_block_forward.1} parent=39 // pred_region
        _
      $region44: #{residual_block_forward.1} parent=39 // pred_fallthru
        _
    $region40: #{residual_block_forward.1} parent=5 // pred_fallthru
      _
    %p2032 = scmp.le.s32.totalorder 2, %s11
    // Predicated region
    $region45: #{residual_block_forward.1} parent=5 // pred_check
      %p2033 = pneg %p2032
    $region46: #{residual_block_forward.1} parent=5 // pred_check_branch
      %2035 = sbr.rel (%p2033) target = $region48
    $region47: #{residual_block_forward.1} parent=5 // pred_region
      %s2036 = ssub.s32 %s11, 2
      // Predicated region
      $region49: #{residual_block_forward.1} parent=47 // pred_check
        %p2037 = pneg %p150
      $region50: #{residual_block_forward.1} parent=47 // pred_check_branch
        %2039 = sbr.rel (%p2037) target = $region52
      $region51: #{residual_block_forward.1} parent=47 // pred_region
        %p2040 = scmp.lt.s32.totalorder %s17, 1
        %s2041 = scalar_select %p2040, %s17, 1
        %s2042 = smul.addr %s2041, 8
        %s2043 = smul.addr %s2042, 8
        %s2044 = scalar_lea.vmem %s5, %s2043
      $region52: #{residual_block_forward.1} parent=47 // pred_fallthru
        _
    $region48: #{residual_block_forward.1} parent=5 // pred_fallthru
      _
  $region6: #{residual_block_forward.1} parent=0 // loop_footer
    %s15 = sadd.s32 1, %s11
  $region7: #{residual_block_forward.1} parent=0 // loop_footer_branch
    %10 = sbr.rel target = $region3
  $region8: #{residual_block_forward.1} parent=0 // loop_exit
    _

</llo_original>
